<compile_context>
chip_gen: v5e
topology: v5e:2x2
jax: 0.10.0
libtpu: 0.0.40
codegen_flags: <defaults>
</compile_context>

<pallas_src>
import functools
import math

import jax
import jax.numpy as jnp
from jax.experimental import pallas as pl
from jax.experimental.pallas import tpu as pltpu

D_MODEL = 32
NUM_HEADS = 4
D_K = D_MODEL // NUM_HEADS
D_FF = 64
LN_EPS = 1e-5


def _decoder_layer_kernel(
        x_ref, cross_ref, smask_ref, cmask_ref,
        kmask_s_ref, kmask_c_ref, bm2_s_ref, bm2_c_ref, lanemask_ref, segsum_ref,
        wqv1_ref, bqv1_ref, wk1t_ref, bk1_ref, wo1_ref, bo1_ref,
        wq2_ref, bq2_ref, wk2t_ref, bk2_ref, wv2_ref, bv2_ref, wo2_ref, bo2_ref,
        lng_ref, lnb_ref, w1_ref, b1_ref, w2_ref, b2_ref,
        out_ref, *, num_heads, compute_dtype):
    f32 = jnp.float32
    cdt = compute_dtype
    H = num_heads
    D = x_ref.shape[-1]
    dk = D // H

    def mm(a, b):                      # MXU matmul, f32 accumulation
        return jnp.dot(a, b, preferred_element_type=f32)

    def mm_nt(a, b):                   # a @ b.T without materializing a transpose
        return jax.lax.dot_general(a, b, (((1,), (1,)), ((), ())),
                                   preferred_element_type=f32)

    def layer_norm(v, idx):
        g = lng_ref[idx]               # (1, D)
        b = lnb_ref[idx]
        mu = jnp.mean(v, axis=-1, keepdims=True)
        var = jnp.mean((v - mu) * (v - mu), axis=-1, keepdims=True)
        return (v - mu) * jax.lax.rsqrt(var + LN_EPS) * g + b

    lanemask = lanemask_ref[...]       # (H*Q, D)   [s, j*dk+d] = (j == s % H)
    segsum = segsum_ref[...]           # (Q, H*Q)   [p, s]      = (s // H == p)

    def attend(q_c, kt_c, v_c, kmask, bm2, keep, wo, bo):
        """One MultiHeadAttention block for a single batch element.

        q_c   (Q, D)      per-head queries in lane blocks (1/sqrt(d_k) prefolded)
        kt_c  (D, Kk)     transposed key projection
        v_c   (Kk, D)     value projection
        kmask (D, H*Kk)   block-diag selector  [c, h*Kk+k]     = (c // dk == h)
        bm2   (H*Q, H*Kk) block-diag selector  [h*Q+q, h'*Kk+k] = (h == h')
        keep  (Q, H*Kk)   attention keep-mask (0/1), heads tiled along lanes
        """
        # scores for all heads, lane-dense: (Q, H*Kk), contraction = D
        kbd = jnp.concatenate([kt_c] * H, axis=1) * kmask
        s = mm(q_c, kbd)
        s = jnp.where(keep == 0.0, jnp.float32(-1e9), s)    # torch masked_fill
        # F.softmax(dim=2) on (B, H, Q, K) == softmax over the *query* axis:
        # one max/exp/sum/reciprocal chain for all heads at once.
        m = jnp.max(s, axis=0, keepdims=True)
        e = jnp.exp(s - m)
        denom = jnp.sum(e, axis=0, keepdims=True)
        inv = pl.reciprocal(denom, approx=True)              # EUP slot
        inv = inv * (2.0 - denom * inv)                      # Newton -> f32 accuracy
        p = (e * inv).astype(cdt)
        # per-(head, query) attention rows:  a[h*Q+q, :] = p_h[q, :] @ v_h
        v_cat = jnp.concatenate(
            [v_c[:, h * dk:(h + 1) * dk] for h in range(H)], axis=0)   # (H*Kk, dk)
        p_tall = jnp.concatenate([p] * H, axis=0) * bm2                # (H*Q, H*Kk)
        a = mm(p_tall, v_cat)                                          # (H*Q, dk) f32
        # torch merges heads with `.view` of the contiguous (H, Q, dk) tensor:
        #   out[q, :] = sum_j a[q*H + j, :] @ Wo[j*dk:(j+1)*dk, :]
        # = (rows placed into their Wo lane block via lanemask) @ Wo, then a
        #   segment-sum over groups of H rows via one matmul with `segsum`.
        y = mm((jnp.concatenate([a] * H, axis=1) * lanemask).astype(cdt), wo)
        return mm(segsum, y.astype(cdt)) + bo                          # (Q, D)

    x = x_ref[...]                     # (Q, D)  f32
    cross = cross_ref[...]             # (K, D)  f32
    x_c = x.astype(cdt)
    cross_c = cross.astype(cdt)

    # ---- self attention + residual + norm (dropout = identity) --------------
    qv1 = mm(x_c, wqv1_ref[...]) + bqv1_ref[...]            # (Q, 2D): [q | v]
    kt1 = mm_nt(wk1t_ref[...], x_c) + bk1_ref[...]          # (D, Q)
    attn1 = attend(qv1[:, :D].astype(cdt), kt1.astype(cdt), qv1[:, D:].astype(cdt),
                   kmask_s_ref[...], bm2_s_ref[...], smask_ref[...],
                   wo1_ref[...], bo1_ref[...])
    x1 = layer_norm(x + attn1, 0)
    x1_c = x1.astype(cdt)

    # ---- cross attention + residual + norm -----------------------------------
    q2 = mm(x1_c, wq2_ref[...]) + bq2_ref[...]              # (Q, D)
    kt2 = mm_nt(wk2t_ref[...], cross_c) + bk2_ref[...]      # (D, K)
    v2 = mm(cross_c, wv2_ref[...]) + bv2_ref[...]           # (K, D)
    attn2 = attend(q2.astype(cdt), kt2.astype(cdt), v2.astype(cdt),
                   kmask_c_ref[...], bm2_c_ref[...], cmask_ref[...],
                   wo2_ref[...], bo2_ref[...])
    x2 = layer_norm(x1 + attn2, 1)
    x2_c = x2.astype(cdt)

    # ---- feed forward + residual + norm --------------------------------------
    hid = jnp.maximum(mm(x2_c, w1_ref[...]) + b1_ref[...], 0.0)
    ff = mm(hid.astype(cdt), w2_ref[...]) + b2_ref[...]
    out_ref[...] = layer_norm(x2 + ff, 2).astype(out_ref.dtype)


@functools.partial(jax.jit, static_argnames=("compute_dtype",))
def decoder_layer_pallas(x, cross, smask, cmask, params, *,
                         compute_dtype=jnp.bfloat16):
    B, Q, D = x.shape
    K = cross.shape[1]
    H = NUM_HEADS
    dk = D // H
    assert D % H == 0 and Q % 8 == 0 and K % 8 == 0
    wa1, ba1, wa2, ba2, lng, lnb, w1, b1, w2, b2 = params
    cdt = compute_dtype
    scale = jnp.float32(1.0 / math.sqrt(dk))

    # ---- parameter prep (wrapper-side, free): fold 1/sqrt(d_k) into Wq/bq,
    #      fuse [Wq|Wv] for self-attn, pre-transpose Wk so the kernel produces
    #      K^T directly with a plain matmul.
    wqv1 = jnp.concatenate([wa1[0] * scale, wa1[2]], axis=1).astype(cdt)   # (D, 2D)
    bqv1 = jnp.concatenate([ba1[0] * scale, ba1[2]], axis=1)               # (1, 2D)
    wk1t = wa1[1].T.astype(cdt)                                            # (D, D)
    bk1 = ba1[1].reshape(D, 1)                                             # (D, 1)
    wo1, bo1 = wa1[3].astype(cdt), ba1[3]
    wq2 = (wa2[0] * scale).astype(cdt)
    bq2 = ba2[0] * scale
    wk2t = wa2[1].T.astype(cdt)
    bk2 = ba2[1].reshape(D, 1)
    wv2, bv2 = wa2[2].astype(cdt), ba2[2]
    wo2, bo2 = wa2[3].astype(cdt), ba2[3]
    w1c, w2c = w1.astype(cdt), w2.astype(cdt)

    # ---- per-batch keep-masks, heads tiled along lanes: (B*Q, H*Kk) ----------
    def head_tiled(mask):
        wide = jnp.concatenate([mask.astype(jnp.float32)] * H, axis=-1)
        return wide.reshape(B * Q, H * mask.shape[-1])
    smaskw = head_tiled(smask)           # (B*Q, H*Q)
    cmaskw = head_tiled(cmask)           # (B*Q, H*K)

    # ---- constant selection masks (hoisted out of the kernel) ----------------
    heads_of_d = jnp.arange(D) // dk                       # lane block -> head
    rows_tall = jnp.arange(H * Q)                          # stacked (head, query) rows

    def sel(i, j):
        return (i[:, None] == j[None, :]).astype(cdt)

    kmask_s = sel(heads_of_d, jnp.arange(H * Q) // Q)      # (D, H*Q)
    kmask_c = sel(heads_of_d, jnp.arange(H * K) // K)      # (D, H*K)
    bm2_s = sel(rows_tall // Q, jnp.arange(H * Q) // Q)    # (H*Q, H*Q)
    bm2_c = sel(rows_tall // Q, jnp.arange(H * K) // K)    # (H*Q, H*K)
    lanemask = sel(rows_tall % H, heads_of_d)              # (H*Q, D)
    segsum = sel(jnp.arange(Q), rows_tall // H)            # (Q, H*Q)

    x2d = x.reshape(B * Q, D)
    cross2d = cross.reshape(B * K, D)

    args = (x2d, cross2d, smaskw, cmaskw,
            kmask_s, kmask_c, bm2_s, bm2_c, lanemask, segsum,
            wqv1, bqv1, wk1t, bk1, wo1, bo1,
            wq2, bq2, wk2t, bk2, wv2, bv2, wo2, bo2,
            lng, lnb, w1c, b1, w2c, b2)

    def resident(a):    # whole (tiny) array, same block every grid step
        return pl.BlockSpec(a.shape, lambda b, _n=a.ndim: (0,) * _n)

    in_specs = [
        pl.BlockSpec((Q, D), lambda b: (b, 0)),            # x rows of batch b
        pl.BlockSpec((K, D), lambda b: (b, 0)),            # cross rows of batch b
        pl.BlockSpec((Q, H * Q), lambda b: (b, 0)),        # self keep-mask
        pl.BlockSpec((Q, H * K), lambda b: (b, 0)),        # cross keep-mask
    ] + [resident(a) for a in args[4:]]

    kernel = functools.partial(_decoder_layer_kernel, num_heads=H,
                               compute_dtype=cdt)

    out2d = pl.pallas_call(
        kernel,
        out_shape=jax.ShapeDtypeStruct((B * Q, D), x.dtype),
        grid=(B,),
        in_specs=in_specs,
        out_specs=pl.BlockSpec((Q, D), lambda b: (b, 0)),
        compiler_params=pltpu.CompilerParams(
            dimension_semantics=("parallel",)),   # v7x: the 2 TCs split the batch
    )(*args)
    return out2d.reshape(B, Q, D)


def decoder_layer_ref(x, cross, smask, cmask, params):
    """Pure-JAX reference mirroring the PyTorch forward exactly."""
    wa1, ba1, wa2, ba2, lng, lnb, w1, b1, w2, b2 = params

    def layer_norm(v, g, b):
        mu = v.mean(-1, keepdims=True)
        var = ((v - mu) ** 2).mean(-1, keepdims=True)
        return (v - mu) / jnp.sqrt(var + LN_EPS) * g + b

    def mha(xq, xkv, w, bias, mask):
        B, Q, _ = xq.shape
        K = xkv.shape[1]
        q = (xq @ w[0] + bias[0]).reshape(B, Q, NUM_HEADS, D_K).transpose(0, 2, 1, 3)
        k = (xkv @ w[1] + bias[1]).reshape(B, K, NUM_HEADS, D_K).transpose(0, 2, 1, 3)
        v = (xkv @ w[2] + bias[2]).reshape(B, K, NUM_HEADS, D_K).transpose(0, 2, 1, 3)
        s = jnp.einsum('bhqd,bhkd->bhqk', q, k) / (D_K ** 0.5)
        s = jnp.where(mask[:, None] == 0, -1e9, s)
        p = jax.nn.softmax(s, axis=2)                 # dim=2 (query axis), as in source
        a = jnp.einsum('bhqk,bhkd->bhqd', p, v)       # (B, H, Q, d_k)
        concat = a.reshape(B, Q, NUM_HEADS * D_K)     # torch .view on contiguous tensor
        return concat @ w[3] + bias[3]

    x1 = layer_norm(x + mha(x, x, wa1, ba1, smask), lng[0], lnb[0])
    x2 = layer_norm(x1 + mha(x1, cross, wa2, ba2, cmask), lng[1], lnb[1])
    ff = jnp.maximum(x2 @ w1 + b1, 0.0) @ w2 + b2
    return layer_norm(x2 + ff, lng[2], lnb[2])


if __name__ == "__main__":
    key = jax.random.PRNGKey(0)
    B, Q, K = 2, 8, 16
    ks = jax.random.split(key, 16)

    def linear(kw, kb, din, dout):
        w = jax.random.normal(kw, (din, dout), jnp.float32) / math.sqrt(din)
        b = 0.1 * jax.random.normal(kb, (1, dout), jnp.float32)
        return w, b

    def attn_params(k):
        kk = jax.random.split(k, 8)
        ws, bs = [], []
        for i in range(4):
            w, b = linear(kk[2 * i], kk[2 * i + 1], D_MODEL, D_MODEL)
            ws.append(w)
            bs.append(b)
        return jnp.stack(ws, 0), jnp.stack(bs, 0)     # (4, D, D), (4, 1, D)

    wa1, ba1 = attn_params(ks[0])
    wa2, ba2 = attn_params(ks[1])
    lng = jnp.stack([1.0 + 0.1 * jax.random.normal(ks[2 + i], (1, D_MODEL), jnp.float32)
                     for i in range(3)], 0)           # (3, 1, D)
    lnb = jnp.stack([0.1 * jax.random.normal(ks[5 + i], (1, D_MODEL), jnp.float32)
                     for i in range(3)], 0)           # (3, 1, D)
    w1, b1 = linear(ks[8], ks[9], D_MODEL, D_FF)
    w2, b2 = linear(ks[10], ks[11], D_FF, D_MODEL)
    params = (wa1, ba1, wa2, ba2, lng, lnb, w1, b1, w2, b2)

    x = jax.random.normal(ks[12], (B, Q, D_MODEL), jnp.float32)
    cross = jax.random.normal(ks[13], (B, K, D_MODEL), jnp.float32)

    # self-attention mask: causal; cross-attention mask: per-batch valid lengths
    smask = jnp.tile(jnp.tril(jnp.ones((Q, Q), jnp.float32))[None], (B, 1, 1))
    lengths = jnp.array([K, K - 3], jnp.int32)
    cmask = (jnp.arange(K)[None, None, :] < lengths[:, None, None]).astype(jnp.float32)
    cmask = jnp.tile(cmask, (1, Q, 1))                # (B, Q, K)

    ref = decoder_layer_ref(x, cross, smask, cmask, params)

    # f32 matmul operands: tight check against the pure-JAX reference.
    out = jax.block_until_ready(
        decoder_layer_pallas(x, cross, smask, cmask, params,
                             compute_dtype=jnp.float32))
    assert out.shape == (B, Q, D_MODEL)
    assert jnp.allclose(out, ref, atol=2e-2, rtol=2e-2), \
        float(jnp.max(jnp.abs(out - ref)))

    # default path: bf16 matmul operands, f32 accumulation (MXU fast path on
    # v5e/v6e/v7x); elementwise math stays f32.
    out_bf16 = jax.block_until_ready(
        decoder_layer_pallas(x, cross, smask, cmask, params))
    assert bool(jnp.all(jnp.isfinite(out_bf16)))
    assert float(jnp.max(jnp.abs(out_bf16 - ref))) < 0.35

    print("KERNEL_OK")
</pallas_src>

<mosaic_0001>
module attributes {stable_mosaic.version = 11 : i64} {
  func.func @_decoder_layer_kernel(%arg0: i32, %arg1: memref<8x32xf32, #tpu.memory_space<vmem>>, %arg2: memref<16x32xf32, #tpu.memory_space<vmem>>, %arg3: memref<8x32xf32, #tpu.memory_space<vmem>>, %arg4: memref<8x64xf32, #tpu.memory_space<vmem>>, %arg5: memref<32x32xf32, #tpu.memory_space<vmem>>, %arg6: memref<32x64xf32, #tpu.memory_space<vmem>>, %arg7: memref<32x32xf32, #tpu.memory_space<vmem>>, %arg8: memref<32x64xf32, #tpu.memory_space<vmem>>, %arg9: memref<32x32xf32, #tpu.memory_space<vmem>>, %arg10: memref<8x32xf32, #tpu.memory_space<vmem>>, %arg11: memref<32x64xf32, #tpu.memory_space<vmem>>, %arg12: memref<1x64xf32, #tpu.memory_space<vmem>>, %arg13: memref<32x32xf32, #tpu.memory_space<vmem>>, %arg14: memref<32x1xf32, #tpu.memory_space<vmem>>, %arg15: memref<32x32xf32, #tpu.memory_space<vmem>>, %arg16: memref<1x32xf32, #tpu.memory_space<vmem>>, %arg17: memref<32x32xf32, #tpu.memory_space<vmem>>, %arg18: memref<1x32xf32, #tpu.memory_space<vmem>>, %arg19: memref<32x32xf32, #tpu.memory_space<vmem>>, %arg20: memref<32x1xf32, #tpu.memory_space<vmem>>, %arg21: memref<32x32xf32, #tpu.memory_space<vmem>>, %arg22: memref<1x32xf32, #tpu.memory_space<vmem>>, %arg23: memref<32x32xf32, #tpu.memory_space<vmem>>, %arg24: memref<1x32xf32, #tpu.memory_space<vmem>>, %arg25: memref<3x1x32xf32, #tpu.memory_space<vmem>>, %arg26: memref<3x1x32xf32, #tpu.memory_space<vmem>>, %arg27: memref<32x64xf32, #tpu.memory_space<vmem>>, %arg28: memref<1x64xf32, #tpu.memory_space<vmem>>, %arg29: memref<64x32xf32, #tpu.memory_space<vmem>>, %arg30: memref<1x32xf32, #tpu.memory_space<vmem>>, %arg31: memref<8x32xf32, #tpu.memory_space<vmem>>) attributes {dimension_semantics = [#tpu.dimension_semantics<parallel>], iteration_bounds = array<i64: 2>, scalar_prefetch = 0 : i64, scratch_operands = 0 : i64, tpu.core_type = #tpu.core_type<tc>, window_params = [{transform_indices = @transform_0, window_bounds = array<i64: 8, 32>}, {transform_indices = @transform_1, window_bounds = array<i64: 16, 32>}, {transform_indices = @transform_2, window_bounds = array<i64: 8, 32>}, {transform_indices = @transform_3, window_bounds = array<i64: 8, 64>}, {pipeline_mode = #tpu.pipeline_mode<synchronous>, transform_indices = @transform_4, window_bounds = array<i64: 32, 32>}, {pipeline_mode = #tpu.pipeline_mode<synchronous>, transform_indices = @transform_5, window_bounds = array<i64: 32, 64>}, {pipeline_mode = #tpu.pipeline_mode<synchronous>, transform_indices = @transform_6, window_bounds = array<i64: 32, 32>}, {pipeline_mode = #tpu.pipeline_mode<synchronous>, transform_indices = @transform_7, window_bounds = array<i64: 32, 64>}, {pipeline_mode = #tpu.pipeline_mode<synchronous>, transform_indices = @transform_8, window_bounds = array<i64: 32, 32>}, {pipeline_mode = #tpu.pipeline_mode<synchronous>, transform_indices = @transform_9, window_bounds = array<i64: 8, 32>}, {pipeline_mode = #tpu.pipeline_mode<synchronous>, transform_indices = @transform_10, window_bounds = array<i64: 32, 64>}, {pipeline_mode = #tpu.pipeline_mode<synchronous>, transform_indices = @transform_11, window_bounds = array<i64: 1, 64>}, {pipeline_mode = #tpu.pipeline_mode<synchronous>, transform_indices = @transform_12, window_bounds = array<i64: 32, 32>}, {pipeline_mode = #tpu.pipeline_mode<synchronous>, transform_indices = @transform_13, window_bounds = array<i64: 32, 1>}, {pipeline_mode = #tpu.pipeline_mode<synchronous>, transform_indices = @transform_14, window_bounds = array<i64: 32, 32>}, {pipeline_mode = #tpu.pipeline_mode<synchronous>, transform_indices = @transform_15, window_bounds = array<i64: 1, 32>}, {pipeline_mode = #tpu.pipeline_mode<synchronous>, transform_indices = @transform_16, window_bounds = array<i64: 32, 32>}, {pipeline_mode = #tpu.pipeline_mode<synchronous>, transform_indices = @transform_17, window_bounds = array<i64: 1, 32>}, {pipeline_mode = #tpu.pipeline_mode<synchronous>, transform_indices = @transform_18, window_bounds = array<i64: 32, 32>}, {pipeline_mode = #tpu.pipeline_mode<synchronous>, transform_indices = @transform_19, window_bounds = array<i64: 32, 1>}, {pipeline_mode = #tpu.pipeline_mode<synchronous>, transform_indices = @transform_20, window_bounds = array<i64: 32, 32>}, {pipeline_mode = #tpu.pipeline_mode<synchronous>, transform_indices = @transform_21, window_bounds = array<i64: 1, 32>}, {pipeline_mode = #tpu.pipeline_mode<synchronous>, transform_indices = @transform_22, window_bounds = array<i64: 32, 32>}, {pipeline_mode = #tpu.pipeline_mode<synchronous>, transform_indices = @transform_23, window_bounds = array<i64: 1, 32>}, {pipeline_mode = #tpu.pipeline_mode<synchronous>, transform_indices = @transform_24, window_bounds = array<i64: 3, 1, 32>}, {pipeline_mode = #tpu.pipeline_mode<synchronous>, transform_indices = @transform_25, window_bounds = array<i64: 3, 1, 32>}, {pipeline_mode = #tpu.pipeline_mode<synchronous>, transform_indices = @transform_26, window_bounds = array<i64: 32, 64>}, {pipeline_mode = #tpu.pipeline_mode<synchronous>, transform_indices = @transform_27, window_bounds = array<i64: 1, 64>}, {pipeline_mode = #tpu.pipeline_mode<synchronous>, transform_indices = @transform_28, window_bounds = array<i64: 64, 32>}, {pipeline_mode = #tpu.pipeline_mode<synchronous>, transform_indices = @transform_29, window_bounds = array<i64: 1, 32>}, {transform_indices = @transform_30, window_bounds = array<i64: 8, 32>}]} {
    %c0 = arith.constant 0 : index
    %c0_0 = arith.constant 0 : index
    %0 = vector.load %arg9[%c0, %c0_0] : memref<32x32xf32, #tpu.memory_space<vmem>>, vector<32x32xf32>
    %c0_1 = arith.constant 0 : index
    %c0_2 = arith.constant 0 : index
    %1 = vector.load %arg10[%c0_1, %c0_2] : memref<8x32xf32, #tpu.memory_space<vmem>>, vector<8x32xf32>
    %c0_3 = arith.constant 0 : index
    %c0_4 = arith.constant 0 : index
    %2 = vector.load %arg1[%c0_3, %c0_4] : memref<8x32xf32, #tpu.memory_space<vmem>>, vector<8x32xf32>
    %c0_5 = arith.constant 0 : index
    %c0_6 = arith.constant 0 : index
    %3 = vector.load %arg2[%c0_5, %c0_6] : memref<16x32xf32, #tpu.memory_space<vmem>>, vector<16x32xf32>
    %c0_7 = arith.constant 0 : index
    %c0_8 = arith.constant 0 : index
    %4 = vector.load %arg11[%c0_7, %c0_8] : memref<32x64xf32, #tpu.memory_space<vmem>>, vector<32x64xf32>
    %cst = arith.constant dense<0.000000e+00> : vector<8x64xf32>
    %5 = tpu.matmul %2, %4, %cst {dimension_numbers = #tpu.dot_dimension_numbers<[1], [0], [0], [1], [0, 0, 1, 1], [], []>} : vector<8x32xf32>, vector<32x64xf32>, vector<8x64xf32> -> vector<8x64xf32>
    %c0_9 = arith.constant 0 : index
    %c0_10 = arith.constant 0 : index
    %6 = vector.load %arg12[%c0_9, %c0_10] : memref<1x64xf32, #tpu.memory_space<vmem>>, vector<1x64xf32>
    %7 = vector.broadcast %6 : vector<1x64xf32> to vector<8x64xf32>
    %8 = arith.addf %5, %7 : vector<8x64xf32>
    %c0_11 = arith.constant 0 : index
    %c0_12 = arith.constant 0 : index
    %9 = vector.load %arg13[%c0_11, %c0_12] : memref<32x32xf32, #tpu.memory_space<vmem>>, vector<32x32xf32>
    %cst_13 = arith.constant dense<0.000000e+00> : vector<32x8xf32>
    %10 = tpu.matmul %9, %2, %cst_13 {dimension_numbers = #tpu.dot_dimension_numbers<[1], [1], [0], [0], [0, 0, 1, 0], [], []>} : vector<32x32xf32>, vector<8x32xf32>, vector<32x8xf32> -> vector<32x8xf32>
    %c0_14 = arith.constant 0 : index
    %c0_15 = arith.constant 0 : index
    %11 = vector.load %arg14[%c0_14, %c0_15] : memref<32x1xf32, #tpu.memory_space<vmem>>, vector<32x1xf32>
    %12 = vector.broadcast %11 : vector<32x1xf32> to vector<32x8xf32>
    %13 = arith.addf %10, %12 : vector<32x8xf32>
    %14 = vector.extract_strided_slice %8 {offsets = [0, 0], sizes = [8, 32], strides = [1, 1]} : vector<8x64xf32> to vector<8x32xf32>
    %15 = vector.extract_strided_slice %8 {offsets = [0, 32], sizes = [8, 32], strides = [1, 1]} : vector<8x64xf32> to vector<8x32xf32>
    %c0_16 = arith.constant 0 : index
    %c0_17 = arith.constant 0 : index
    %16 = vector.load %arg5[%c0_16, %c0_17] : memref<32x32xf32, #tpu.memory_space<vmem>>, vector<32x32xf32>
    %c0_18 = arith.constant 0 : index
    %c0_19 = arith.constant 0 : index
    %17 = vector.load %arg7[%c0_18, %c0_19] : memref<32x32xf32, #tpu.memory_space<vmem>>, vector<32x32xf32>
    %c0_20 = arith.constant 0 : index
    %c0_21 = arith.constant 0 : index
    %18 = vector.load %arg3[%c0_20, %c0_21] : memref<8x32xf32, #tpu.memory_space<vmem>>, vector<8x32xf32>
    %c0_22 = arith.constant 0 : index
    %c0_23 = arith.constant 0 : index
    %19 = vector.load %arg15[%c0_22, %c0_23] : memref<32x32xf32, #tpu.memory_space<vmem>>, vector<32x32xf32>
    %c0_24 = arith.constant 0 : index
    %c0_25 = arith.constant 0 : index
    %20 = vector.load %arg16[%c0_24, %c0_25] : memref<1x32xf32, #tpu.memory_space<vmem>>, vector<1x32xf32>
    %21 = tpu.concatenate %13, %13, %13, %13 in 1 : vector<32x8xf32>, vector<32x8xf32>, vector<32x8xf32>, vector<32x8xf32> -> vector<32x32xf32>
    %22 = arith.mulf %21, %16 : vector<32x32xf32>
    %cst_26 = arith.constant dense<0.000000e+00> : vector<8x32xf32>
    %23 = tpu.matmul %14, %22, %cst_26 {dimension_numbers = #tpu.dot_dimension_numbers<[1], [0], [0], [1], [0, 0, 1, 1], [], []>} : vector<8x32xf32>, vector<32x32xf32>, vector<8x32xf32> -> vector<8x32xf32>
    %cst_27 = arith.constant 0.000000e+00 : f32
    %24 = vector.broadcast %cst_27 : f32 to vector<8x32xf32>
    %25 = arith.cmpf oeq, %18, %24 : vector<8x32xf32>
    %cst_28 = arith.constant -1.000000e+09 : f32
    %26 = vector.broadcast %cst_28 : f32 to vector<8x32xf32>
    %27 = arith.select %25, %26, %23 : vector<8x32xi1>, vector<8x32xf32>
    %cst_29 = arith.constant dense<0xFF800000> : vector<32xf32>
    %28 = vector.multi_reduction <maximumf>, %27, %cst_29 [0] : vector<8x32xf32> to vector<32xf32>
    %29 = vector.shape_cast %28 : vector<32xf32> to vector<1x32xf32>
    %30 = vector.broadcast %29 : vector<1x32xf32> to vector<8x32xf32>
    %31 = arith.subf %27, %30 : vector<8x32xf32>
    %32 = math.exp %31 : vector<8x32xf32>
    %cst_30 = arith.constant dense<0.000000e+00> : vector<32xf32>
    %33 = vector.multi_reduction <add>, %32, %cst_30 [0] : vector<8x32xf32> to vector<32xf32>
    %34 = vector.shape_cast %33 : vector<32xf32> to vector<1x32xf32>
    %35 = tpu.reciprocal %34 {approx = true} : vector<1x32xf32> -> vector<1x32xf32>
    %36 = arith.mulf %34, %35 : vector<1x32xf32>
    %cst_31 = arith.constant 2.000000e+00 : f32
    %37 = vector.broadcast %cst_31 : f32 to vector<1x32xf32>
    %38 = arith.subf %37, %36 : vector<1x32xf32>
    %39 = arith.mulf %35, %38 : vector<1x32xf32>
    %40 = vector.broadcast %39 : vector<1x32xf32> to vector<8x32xf32>
    %41 = arith.mulf %32, %40 : vector<8x32xf32>
    %42 = vector.extract_strided_slice %15 {offsets = [0, 0], sizes = [8, 8], strides = [1, 1]} : vector<8x32xf32> to vector<8x8xf32>
    %43 = vector.extract_strided_slice %15 {offsets = [0, 8], sizes = [8, 8], strides = [1, 1]} : vector<8x32xf32> to vector<8x8xf32>
    %44 = vector.extract_strided_slice %15 {offsets = [0, 16], sizes = [8, 8], strides = [1, 1]} : vector<8x32xf32> to vector<8x8xf32>
    %45 = vector.extract_strided_slice %15 {offsets = [0, 24], sizes = [8, 8], strides = [1, 1]} : vector<8x32xf32> to vector<8x8xf32>
    %46 = tpu.concatenate %42, %43, %44, %45 in 0 : vector<8x8xf32>, vector<8x8xf32>, vector<8x8xf32>, vector<8x8xf32> -> vector<32x8xf32>
    %47 = tpu.concatenate %41, %41, %41, %41 in 0 : vector<8x32xf32>, vector<8x32xf32>, vector<8x32xf32>, vector<8x32xf32> -> vector<32x32xf32>
    %48 = arith.mulf %47, %17 : vector<32x32xf32>
    %cst_32 = arith.constant dense<0.000000e+00> : vector<32x8xf32>
    %49 = tpu.matmul %48, %46, %cst_32 {dimension_numbers = #tpu.dot_dimension_numbers<[1], [0], [0], [1], [0, 0, 1, 1], [], []>} : vector<32x32xf32>, vector<32x8xf32>, vector<32x8xf32> -> vector<32x8xf32>
    %50 = tpu.concatenate %49, %49, %49, %49 in 1 : vector<32x8xf32>, vector<32x8xf32>, vector<32x8xf32>, vector<32x8xf32> -> vector<32x32xf32>
    %51 = arith.mulf %50, %0 : vector<32x32xf32>
    %cst_33 = arith.constant dense<0.000000e+00> : vector<32x32xf32>
    %52 = tpu.matmul %51, %19, %cst_33 {dimension_numbers = #tpu.dot_dimension_numbers<[1], [0], [0], [1], [0, 0, 1, 1], [], []>} : vector<32x32xf32>, vector<32x32xf32>, vector<32x32xf32> -> vector<32x32xf32>
    %cst_34 = arith.constant dense<0.000000e+00> : vector<8x32xf32>
    %53 = tpu.matmul %1, %52, %cst_34 {dimension_numbers = #tpu.dot_dimension_numbers<[1], [0], [0], [1], [0, 0, 1, 1], [], []>} : vector<8x32xf32>, vector<32x32xf32>, vector<8x32xf32> -> vector<8x32xf32>
    %54 = vector.broadcast %20 : vector<1x32xf32> to vector<8x32xf32>
    %55 = arith.addf %53, %54 : vector<8x32xf32>
    %56 = arith.addf %2, %55 : vector<8x32xf32>
    %c0_35 = arith.constant 0 : index
    %c0_36 = arith.constant 0 : index
    %c0_37 = arith.constant 0 : index
    %57 = vector.load %arg25[%c0_35, %c0_36, %c0_37] : memref<3x1x32xf32, #tpu.memory_space<vmem>>, vector<1x1x32xf32>
    %58 = vector.shape_cast %57 : vector<1x1x32xf32> to vector<1x32xf32>
    %c0_38 = arith.constant 0 : index
    %c0_39 = arith.constant 0 : index
    %c0_40 = arith.constant 0 : index
    %59 = vector.load %arg26[%c0_38, %c0_39, %c0_40] : memref<3x1x32xf32, #tpu.memory_space<vmem>>, vector<1x1x32xf32>
    %60 = vector.shape_cast %59 : vector<1x1x32xf32> to vector<1x32xf32>
    %cst_41 = arith.constant dense<0.000000e+00> : vector<8xf32>
    %61 = vector.multi_reduction <add>, %56, %cst_41 [1] : vector<8x32xf32> to vector<8xf32>
    %62 = vector.shape_cast %61 : vector<8xf32> to vector<8x1xf32>
    %cst_42 = arith.constant 3.200000e+01 : f32
    %63 = vector.broadcast %cst_42 : f32 to vector<8x1xf32>
    %64 = arith.divf %62, %63 : vector<8x1xf32>
    %65 = vector.broadcast %64 : vector<8x1xf32> to vector<8x32xf32>
    %66 = arith.subf %56, %65 : vector<8x32xf32>
    %67 = vector.broadcast %64 : vector<8x1xf32> to vector<8x32xf32>
    %68 = arith.subf %56, %67 : vector<8x32xf32>
    %69 = arith.mulf %66, %68 : vector<8x32xf32>
    %cst_43 = arith.constant dense<0.000000e+00> : vector<8xf32>
    %70 = vector.multi_reduction <add>, %69, %cst_43 [1] : vector<8x32xf32> to vector<8xf32>
    %71 = vector.shape_cast %70 : vector<8xf32> to vector<8x1xf32>
    %cst_44 = arith.constant 3.200000e+01 : f32
    %72 = vector.broadcast %cst_44 : f32 to vector<8x1xf32>
    %73 = arith.divf %71, %72 : vector<8x1xf32>
    %74 = vector.broadcast %64 : vector<8x1xf32> to vector<8x32xf32>
    %75 = arith.subf %56, %74 : vector<8x32xf32>
    %cst_45 = arith.constant 9.99999974E-6 : f32
    %76 = vector.broadcast %cst_45 : f32 to vector<8x1xf32>
    %77 = arith.addf %73, %76 : vector<8x1xf32>
    %78 = math.rsqrt %77 : vector<8x1xf32>
    %79 = vector.broadcast %78 : vector<8x1xf32> to vector<8x32xf32>
    %80 = arith.mulf %75, %79 : vector<8x32xf32>
    %81 = vector.broadcast %58 : vector<1x32xf32> to vector<8x32xf32>
    %82 = arith.mulf %80, %81 : vector<8x32xf32>
    %83 = vector.broadcast %60 : vector<1x32xf32> to vector<8x32xf32>
    %84 = arith.addf %82, %83 : vector<8x32xf32>
    %c0_46 = arith.constant 0 : index
    %c0_47 = arith.constant 0 : index
    %85 = vector.load %arg17[%c0_46, %c0_47] : memref<32x32xf32, #tpu.memory_space<vmem>>, vector<32x32xf32>
    %cst_48 = arith.constant dense<0.000000e+00> : vector<8x32xf32>
    %86 = tpu.matmul %84, %85, %cst_48 {dimension_numbers = #tpu.dot_dimension_numbers<[1], [0], [0], [1], [0, 0, 1, 1], [], []>} : vector<8x32xf32>, vector<32x32xf32>, vector<8x32xf32> -> vector<8x32xf32>
    %c0_49 = arith.constant 0 : index
    %c0_50 = arith.constant 0 : index
    %87 = vector.load %arg18[%c0_49, %c0_50] : memref<1x32xf32, #tpu.memory_space<vmem>>, vector<1x32xf32>
    %88 = vector.broadcast %87 : vector<1x32xf32> to vector<8x32xf32>
    %89 = arith.addf %86, %88 : vector<8x32xf32>
    %c0_51 = arith.constant 0 : index
    %c0_52 = arith.constant 0 : index
    %90 = vector.load %arg19[%c0_51, %c0_52] : memref<32x32xf32, #tpu.memory_space<vmem>>, vector<32x32xf32>
    %cst_53 = arith.constant dense<0.000000e+00> : vector<32x16xf32>
    %91 = tpu.matmul %90, %3, %cst_53 {dimension_numbers = #tpu.dot_dimension_numbers<[1], [1], [0], [0], [0, 0, 1, 0], [], []>} : vector<32x32xf32>, vector<16x32xf32>, vector<32x16xf32> -> vector<32x16xf32>
    %c0_54 = arith.constant 0 : index
    %c0_55 = arith.constant 0 : index
    %92 = vector.load %arg20[%c0_54, %c0_55] : memref<32x1xf32, #tpu.memory_space<vmem>>, vector<32x1xf32>
    %93 = vector.broadcast %92 : vector<32x1xf32> to vector<32x16xf32>
    %94 = arith.addf %91, %93 : vector<32x16xf32>
    %c0_56 = arith.constant 0 : index
    %c0_57 = arith.constant 0 : index
    %95 = vector.load %arg21[%c0_56, %c0_57] : memref<32x32xf32, #tpu.memory_space<vmem>>, vector<32x32xf32>
    %cst_58 = arith.constant dense<0.000000e+00> : vector<16x32xf32>
    %96 = tpu.matmul %3, %95, %cst_58 {dimension_numbers = #tpu.dot_dimension_numbers<[1], [0], [0], [1], [0, 0, 1, 1], [], []>} : vector<16x32xf32>, vector<32x32xf32>, vector<16x32xf32> -> vector<16x32xf32>
    %c0_59 = arith.constant 0 : index
    %c0_60 = arith.constant 0 : index
    %97 = vector.load %arg22[%c0_59, %c0_60] : memref<1x32xf32, #tpu.memory_space<vmem>>, vector<1x32xf32>
    %98 = vector.broadcast %97 : vector<1x32xf32> to vector<16x32xf32>
    %99 = arith.addf %96, %98 : vector<16x32xf32>
    %c0_61 = arith.constant 0 : index
    %c0_62 = arith.constant 0 : index
    %100 = vector.load %arg6[%c0_61, %c0_62] : memref<32x64xf32, #tpu.memory_space<vmem>>, vector<32x64xf32>
    %c0_63 = arith.constant 0 : index
    %c0_64 = arith.constant 0 : index
    %101 = vector.load %arg8[%c0_63, %c0_64] : memref<32x64xf32, #tpu.memory_space<vmem>>, vector<32x64xf32>
    %c0_65 = arith.constant 0 : index
    %c0_66 = arith.constant 0 : index
    %102 = vector.load %arg4[%c0_65, %c0_66] : memref<8x64xf32, #tpu.memory_space<vmem>>, vector<8x64xf32>
    %c0_67 = arith.constant 0 : index
    %c0_68 = arith.constant 0 : index
    %103 = vector.load %arg23[%c0_67, %c0_68] : memref<32x32xf32, #tpu.memory_space<vmem>>, vector<32x32xf32>
    %c0_69 = arith.constant 0 : index
    %c0_70 = arith.constant 0 : index
    %104 = vector.load %arg24[%c0_69, %c0_70] : memref<1x32xf32, #tpu.memory_space<vmem>>, vector<1x32xf32>
    %105 = tpu.concatenate %94, %94, %94, %94 in 1 : vector<32x16xf32>, vector<32x16xf32>, vector<32x16xf32>, vector<32x16xf32> -> vector<32x64xf32>
    %106 = arith.mulf %105, %100 : vector<32x64xf32>
    %cst_71 = arith.constant dense<0.000000e+00> : vector<8x64xf32>
    %107 = tpu.matmul %89, %106, %cst_71 {dimension_numbers = #tpu.dot_dimension_numbers<[1], [0], [0], [1], [0, 0, 1, 1], [], []>} : vector<8x32xf32>, vector<32x64xf32>, vector<8x64xf32> -> vector<8x64xf32>
    %cst_72 = arith.constant 0.000000e+00 : f32
    %108 = vector.broadcast %cst_72 : f32 to vector<8x64xf32>
    %109 = arith.cmpf oeq, %102, %108 : vector<8x64xf32>
    %cst_73 = arith.constant -1.000000e+09 : f32
    %110 = vector.broadcast %cst_73 : f32 to vector<8x64xf32>
    %111 = arith.select %109, %110, %107 : vector<8x64xi1>, vector<8x64xf32>
    %cst_74 = arith.constant dense<0xFF800000> : vector<64xf32>
    %112 = vector.multi_reduction <maximumf>, %111, %cst_74 [0] : vector<8x64xf32> to vector<64xf32>
    %113 = vector.shape_cast %112 : vector<64xf32> to vector<1x64xf32>
    %114 = vector.broadcast %113 : vector<1x64xf32> to vector<8x64xf32>
    %115 = arith.subf %111, %114 : vector<8x64xf32>
    %116 = math.exp %115 : vector<8x64xf32>
    %cst_75 = arith.constant dense<0.000000e+00> : vector<64xf32>
    %117 = vector.multi_reduction <add>, %116, %cst_75 [0] : vector<8x64xf32> to vector<64xf32>
    %118 = vector.shape_cast %117 : vector<64xf32> to vector<1x64xf32>
    %119 = tpu.reciprocal %118 {approx = true} : vector<1x64xf32> -> vector<1x64xf32>
    %120 = arith.mulf %118, %119 : vector<1x64xf32>
    %cst_76 = arith.constant 2.000000e+00 : f32
    %121 = vector.broadcast %cst_76 : f32 to vector<1x64xf32>
    %122 = arith.subf %121, %120 : vector<1x64xf32>
    %123 = arith.mulf %119, %122 : vector<1x64xf32>
    %124 = vector.broadcast %123 : vector<1x64xf32> to vector<8x64xf32>
    %125 = arith.mulf %116, %124 : vector<8x64xf32>
    %126 = vector.extract_strided_slice %99 {offsets = [0, 0], sizes = [16, 8], strides = [1, 1]} : vector<16x32xf32> to vector<16x8xf32>
    %127 = vector.extract_strided_slice %99 {offsets = [0, 8], sizes = [16, 8], strides = [1, 1]} : vector<16x32xf32> to vector<16x8xf32>
    %128 = vector.extract_strided_slice %99 {offsets = [0, 16], sizes = [16, 8], strides = [1, 1]} : vector<16x32xf32> to vector<16x8xf32>
    %129 = vector.extract_strided_slice %99 {offsets = [0, 24], sizes = [16, 8], strides = [1, 1]} : vector<16x32xf32> to vector<16x8xf32>
    %130 = tpu.concatenate %126, %127, %128, %129 in 0 : vector<16x8xf32>, vector<16x8xf32>, vector<16x8xf32>, vector<16x8xf32> -> vector<64x8xf32>
    %131 = tpu.concatenate %125, %125, %125, %125 in 0 : vector<8x64xf32>, vector<8x64xf32>, vector<8x64xf32>, vector<8x64xf32> -> vector<32x64xf32>
    %132 = arith.mulf %131, %101 : vector<32x64xf32>
    %cst_77 = arith.constant dense<0.000000e+00> : vector<32x8xf32>
    %133 = tpu.matmul %132, %130, %cst_77 {dimension_numbers = #tpu.dot_dimension_numbers<[1], [0], [0], [1], [0, 0, 1, 1], [], []>} : vector<32x64xf32>, vector<64x8xf32>, vector<32x8xf32> -> vector<32x8xf32>
    %134 = tpu.concatenate %133, %133, %133, %133 in 1 : vector<32x8xf32>, vector<32x8xf32>, vector<32x8xf32>, vector<32x8xf32> -> vector<32x32xf32>
    %135 = arith.mulf %134, %0 : vector<32x32xf32>
    %cst_78 = arith.constant dense<0.000000e+00> : vector<32x32xf32>
    %136 = tpu.matmul %135, %103, %cst_78 {dimension_numbers = #tpu.dot_dimension_numbers<[1], [0], [0], [1], [0, 0, 1, 1], [], []>} : vector<32x32xf32>, vector<32x32xf32>, vector<32x32xf32> -> vector<32x32xf32>
    %cst_79 = arith.constant dense<0.000000e+00> : vector<8x32xf32>
    %137 = tpu.matmul %1, %136, %cst_79 {dimension_numbers = #tpu.dot_dimension_numbers<[1], [0], [0], [1], [0, 0, 1, 1], [], []>} : vector<8x32xf32>, vector<32x32xf32>, vector<8x32xf32> -> vector<8x32xf32>
    %138 = vector.broadcast %104 : vector<1x32xf32> to vector<8x32xf32>
    %139 = arith.addf %137, %138 : vector<8x32xf32>
    %140 = arith.addf %84, %139 : vector<8x32xf32>
    %c1 = arith.constant 1 : index
    %c0_80 = arith.constant 0 : index
    %c0_81 = arith.constant 0 : index
    %141 = vector.load %arg25[%c1, %c0_80, %c0_81] : memref<3x1x32xf32, #tpu.memory_space<vmem>>, vector<1x1x32xf32>
    %142 = vector.shape_cast %141 : vector<1x1x32xf32> to vector<1x32xf32>
    %c1_82 = arith.constant 1 : index
    %c0_83 = arith.constant 0 : index
    %c0_84 = arith.constant 0 : index
    %143 = vector.load %arg26[%c1_82, %c0_83, %c0_84] : memref<3x1x32xf32, #tpu.memory_space<vmem>>, vector<1x1x32xf32>
    %144 = vector.shape_cast %143 : vector<1x1x32xf32> to vector<1x32xf32>
    %cst_85 = arith.constant dense<0.000000e+00> : vector<8xf32>
    %145 = vector.multi_reduction <add>, %140, %cst_85 [1] : vector<8x32xf32> to vector<8xf32>
    %146 = vector.shape_cast %145 : vector<8xf32> to vector<8x1xf32>
    %cst_86 = arith.constant 3.200000e+01 : f32
    %147 = vector.broadcast %cst_86 : f32 to vector<8x1xf32>
    %148 = arith.divf %146, %147 : vector<8x1xf32>
    %149 = vector.broadcast %148 : vector<8x1xf32> to vector<8x32xf32>
    %150 = arith.subf %140, %149 : vector<8x32xf32>
    %151 = vector.broadcast %148 : vector<8x1xf32> to vector<8x32xf32>
    %152 = arith.subf %140, %151 : vector<8x32xf32>
    %153 = arith.mulf %150, %152 : vector<8x32xf32>
    %cst_87 = arith.constant dense<0.000000e+00> : vector<8xf32>
    %154 = vector.multi_reduction <add>, %153, %cst_87 [1] : vector<8x32xf32> to vector<8xf32>
    %155 = vector.shape_cast %154 : vector<8xf32> to vector<8x1xf32>
    %cst_88 = arith.constant 3.200000e+01 : f32
    %156 = vector.broadcast %cst_88 : f32 to vector<8x1xf32>
    %157 = arith.divf %155, %156 : vector<8x1xf32>
    %158 = vector.broadcast %148 : vector<8x1xf32> to vector<8x32xf32>
    %159 = arith.subf %140, %158 : vector<8x32xf32>
    %cst_89 = arith.constant 9.99999974E-6 : f32
    %160 = vector.broadcast %cst_89 : f32 to vector<8x1xf32>
    %161 = arith.addf %157, %160 : vector<8x1xf32>
    %162 = math.rsqrt %161 : vector<8x1xf32>
    %163 = vector.broadcast %162 : vector<8x1xf32> to vector<8x32xf32>
    %164 = arith.mulf %159, %163 : vector<8x32xf32>
    %165 = vector.broadcast %142 : vector<1x32xf32> to vector<8x32xf32>
    %166 = arith.mulf %164, %165 : vector<8x32xf32>
    %167 = vector.broadcast %144 : vector<1x32xf32> to vector<8x32xf32>
    %168 = arith.addf %166, %167 : vector<8x32xf32>
    %c0_90 = arith.constant 0 : index
    %c0_91 = arith.constant 0 : index
    %169 = vector.load %arg27[%c0_90, %c0_91] : memref<32x64xf32, #tpu.memory_space<vmem>>, vector<32x64xf32>
    %cst_92 = arith.constant dense<0.000000e+00> : vector<8x64xf32>
    %170 = tpu.matmul %168, %169, %cst_92 {dimension_numbers = #tpu.dot_dimension_numbers<[1], [0], [0], [1], [0, 0, 1, 1], [], []>} : vector<8x32xf32>, vector<32x64xf32>, vector<8x64xf32> -> vector<8x64xf32>
    %c0_93 = arith.constant 0 : index
    %c0_94 = arith.constant 0 : index
    %171 = vector.load %arg28[%c0_93, %c0_94] : memref<1x64xf32, #tpu.memory_space<vmem>>, vector<1x64xf32>
    %172 = vector.broadcast %171 : vector<1x64xf32> to vector<8x64xf32>
    %173 = arith.addf %170, %172 : vector<8x64xf32>
    %cst_95 = arith.constant 0.000000e+00 : f32
    %174 = vector.broadcast %cst_95 : f32 to vector<8x64xf32>
    %175 = arith.maximumf %173, %174 : vector<8x64xf32>
    %c0_96 = arith.constant 0 : index
    %c0_97 = arith.constant 0 : index
    %176 = vector.load %arg29[%c0_96, %c0_97] : memref<64x32xf32, #tpu.memory_space<vmem>>, vector<64x32xf32>
    %cst_98 = arith.constant dense<0.000000e+00> : vector<8x32xf32>
    %177 = tpu.matmul %175, %176, %cst_98 {dimension_numbers = #tpu.dot_dimension_numbers<[1], [0], [0], [1], [0, 0, 1, 1], [], []>} : vector<8x64xf32>, vector<64x32xf32>, vector<8x32xf32> -> vector<8x32xf32>
    %c0_99 = arith.constant 0 : index
    %c0_100 = arith.constant 0 : index
    %178 = vector.load %arg30[%c0_99, %c0_100] : memref<1x32xf32, #tpu.memory_space<vmem>>, vector<1x32xf32>
    %179 = vector.broadcast %178 : vector<1x32xf32> to vector<8x32xf32>
    %180 = arith.addf %177, %179 : vector<8x32xf32>
    %181 = arith.addf %168, %180 : vector<8x32xf32>
    %c2 = arith.constant 2 : index
    %c0_101 = arith.constant 0 : index
    %c0_102 = arith.constant 0 : index
    %182 = vector.load %arg25[%c2, %c0_101, %c0_102] : memref<3x1x32xf32, #tpu.memory_space<vmem>>, vector<1x1x32xf32>
    %183 = vector.shape_cast %182 : vector<1x1x32xf32> to vector<1x32xf32>
    %c2_103 = arith.constant 2 : index
    %c0_104 = arith.constant 0 : index
    %c0_105 = arith.constant 0 : index
    %184 = vector.load %arg26[%c2_103, %c0_104, %c0_105] : memref<3x1x32xf32, #tpu.memory_space<vmem>>, vector<1x1x32xf32>
    %185 = vector.shape_cast %184 : vector<1x1x32xf32> to vector<1x32xf32>
    %cst_106 = arith.constant dense<0.000000e+00> : vector<8xf32>
    %186 = vector.multi_reduction <add>, %181, %cst_106 [1] : vector<8x32xf32> to vector<8xf32>
    %187 = vector.shape_cast %186 : vector<8xf32> to vector<8x1xf32>
    %cst_107 = arith.constant 3.200000e+01 : f32
    %188 = vector.broadcast %cst_107 : f32 to vector<8x1xf32>
    %189 = arith.divf %187, %188 : vector<8x1xf32>
    %190 = vector.broadcast %189 : vector<8x1xf32> to vector<8x32xf32>
    %191 = arith.subf %181, %190 : vector<8x32xf32>
    %192 = vector.broadcast %189 : vector<8x1xf32> to vector<8x32xf32>
    %193 = arith.subf %181, %192 : vector<8x32xf32>
    %194 = arith.mulf %191, %193 : vector<8x32xf32>
    %cst_108 = arith.constant dense<0.000000e+00> : vector<8xf32>
    %195 = vector.multi_reduction <add>, %194, %cst_108 [1] : vector<8x32xf32> to vector<8xf32>
    %196 = vector.shape_cast %195 : vector<8xf32> to vector<8x1xf32>
    %cst_109 = arith.constant 3.200000e+01 : f32
    %197 = vector.broadcast %cst_109 : f32 to vector<8x1xf32>
    %198 = arith.divf %196, %197 : vector<8x1xf32>
    %199 = vector.broadcast %189 : vector<8x1xf32> to vector<8x32xf32>
    %200 = arith.subf %181, %199 : vector<8x32xf32>
    %cst_110 = arith.constant 9.99999974E-6 : f32
    %201 = vector.broadcast %cst_110 : f32 to vector<8x1xf32>
    %202 = arith.addf %198, %201 : vector<8x1xf32>
    %203 = math.rsqrt %202 : vector<8x1xf32>
    %204 = vector.broadcast %203 : vector<8x1xf32> to vector<8x32xf32>
    %205 = arith.mulf %200, %204 : vector<8x32xf32>
    %206 = vector.broadcast %183 : vector<1x32xf32> to vector<8x32xf32>
    %207 = arith.mulf %205, %206 : vector<8x32xf32>
    %208 = vector.broadcast %185 : vector<1x32xf32> to vector<8x32xf32>
    %209 = arith.addf %207, %208 : vector<8x32xf32>
    %c0_111 = arith.constant 0 : index
    %c0_112 = arith.constant 0 : index
    %210 = vector.load %arg31[%c0_111, %c0_112] : memref<8x32xf32, #tpu.memory_space<vmem>>, vector<8x32xf32>
    tpu.vector_store %arg31[%c0_111, %c0_112], %209 {strides = array<i32>} : memref<8x32xf32, #tpu.memory_space<vmem>>, vector<8x32xf32>,
    return
  }
  func.func @transform_0(%arg0: i32) -> (i32, i32) {
    %c0_i32 = arith.constant 0 : i32
    %c0_i32_0 = arith.constant 0 : i32
    return %arg0, %c0_i32 : i32, i32
  }
  func.func @transform_1(%arg0: i32) -> (i32, i32) {
    %c0_i32 = arith.constant 0 : i32
    %c0_i32_0 = arith.constant 0 : i32
    return %arg0, %c0_i32 : i32, i32
  }
  func.func @transform_2(%arg0: i32) -> (i32, i32) {
    %c0_i32 = arith.constant 0 : i32
    %c0_i32_0 = arith.constant 0 : i32
    return %arg0, %c0_i32 : i32, i32
  }
  func.func @transform_3(%arg0: i32) -> (i32, i32) {
    %c0_i32 = arith.constant 0 : i32
    %c0_i32_0 = arith.constant 0 : i32
    return %arg0, %c0_i32 : i32, i32
  }
  func.func @transform_4(%arg0: i32) -> (i32, i32) {
    %c0_i32 = arith.constant 0 : i32
    %c0_i32_0 = arith.constant 0 : i32
    %c0_i32_1 = arith.constant 0 : i32
    return %c0_i32, %c0_i32_0 : i32, i32
  }
  func.func @transform_5(%arg0: i32) -> (i32, i32) {
    %c0_i32 = arith.constant 0 : i32
    %c0_i32_0 = arith.constant 0 : i32
    %c0_i32_1 = arith.constant 0 : i32
    return %c0_i32, %c0_i32_0 : i32, i32
  }
  func.func @transform_6(%arg0: i32) -> (i32, i32) {
    %c0_i32 = arith.constant 0 : i32
    %c0_i32_0 = arith.constant 0 : i32
    %c0_i32_1 = arith.constant 0 : i32
    return %c0_i32, %c0_i32_0 : i32, i32
  }
  func.func @transform_7(%arg0: i32) -> (i32, i32) {
    %c0_i32 = arith.constant 0 : i32
    %c0_i32_0 = arith.constant 0 : i32
    %c0_i32_1 = arith.constant 0 : i32
    return %c0_i32, %c0_i32_0 : i32, i32
  }
  func.func @transform_8(%arg0: i32) -> (i32, i32) {
    %c0_i32 = arith.constant 0 : i32
    %c0_i32_0 = arith.constant 0 : i32
    %c0_i32_1 = arith.constant 0 : i32
    return %c0_i32, %c0_i32_0 : i32, i32
  }
  func.func @transform_9(%arg0: i32) -> (i32, i32) {
    %c0_i32 = arith.constant 0 : i32
    %c0_i32_0 = arith.constant 0 : i32
    %c0_i32_1 = arith.constant 0 : i32
    return %c0_i32, %c0_i32_0 : i32, i32
  }
  func.func @transform_10(%arg0: i32) -> (i32, i32) {
    %c0_i32 = arith.constant 0 : i32
    %c0_i32_0 = arith.constant 0 : i32
    %c0_i32_1 = arith.constant 0 : i32
    return %c0_i32, %c0_i32_0 : i32, i32
  }
  func.func @transform_11(%arg0: i32) -> (i32, i32) {
    %c0_i32 = arith.constant 0 : i32
    %c0_i32_0 = arith.constant 0 : i32
    %c0_i32_1 = arith.constant 0 : i32
    return %c0_i32, %c0_i32_0 : i32, i32
  }
  func.func @transform_12(%arg0: i32) -> (i32, i32) {
    %c0_i32 = arith.constant 0 : i32
    %c0_i32_0 = arith.constant 0 : i32
    %c0_i32_1 = arith.constant 0 : i32
    return %c0_i32, %c0_i32_0 : i32, i32
  }
  func.func @transform_13(%arg0: i32) -> (i32, i32) {
    %c0_i32 = arith.constant 0 : i32
    %c0_i32_0 = arith.constant 0 : i32
    %c0_i32_1 = arith.constant 0 : i32
    return %c0_i32, %c0_i32_0 : i32, i32
  }
  func.func @transform_14(%arg0: i32) -> (i32, i32) {
    %c0_i32 = arith.constant 0 : i32
    %c0_i32_0 = arith.constant 0 : i32
    %c0_i32_1 = arith.constant 0 : i32
    return %c0_i32, %c0_i32_0 : i32, i32
  }
  func.func @transform_15(%arg0: i32) -> (i32, i32) {
    %c0_i32 = arith.constant 0 : i32
    %c0_i32_0 = arith.constant 0 : i32
    %c0_i32_1 = arith.constant 0 : i32
    return %c0_i32, %c0_i32_0 : i32, i32
  }
  func.func @transform_16(%arg0: i32) -> (i32, i32) {
    %c0_i32 = arith.constant 0 : i32
    %c0_i32_0 = arith.constant 0 : i32
    %c0_i32_1 = arith.constant 0 : i32
    return %c0_i32, %c0_i32_0 : i32, i32
  }
  func.func @transform_17(%arg0: i32) -> (i32, i32) {
    %c0_i32 = arith.constant 0 : i32
    %c0_i32_0 = arith.constant 0 : i32
    %c0_i32_1 = arith.constant 0 : i32
    return %c0_i32, %c0_i32_0 : i32, i32
  }
  func.func @transform_18(%arg0: i32) -> (i32, i32) {
    %c0_i32 = arith.constant 0 : i32
    %c0_i32_0 = arith.constant 0 : i32
    %c0_i32_1 = arith.constant 0 : i32
    return %c0_i32, %c0_i32_0 : i32, i32
  }
  func.func @transform_19(%arg0: i32) -> (i32, i32) {
    %c0_i32 = arith.constant 0 : i32
    %c0_i32_0 = arith.constant 0 : i32
    %c0_i32_1 = arith.constant 0 : i32
    return %c0_i32, %c0_i32_0 : i32, i32
  }
  func.func @transform_20(%arg0: i32) -> (i32, i32) {
    %c0_i32 = arith.constant 0 : i32
    %c0_i32_0 = arith.constant 0 : i32
    %c0_i32_1 = arith.constant 0 : i32
    return %c0_i32, %c0_i32_0 : i32, i32
  }
  func.func @transform_21(%arg0: i32) -> (i32, i32) {
    %c0_i32 = arith.constant 0 : i32
    %c0_i32_0 = arith.constant 0 : i32
    %c0_i32_1 = arith.constant 0 : i32
    return %c0_i32, %c0_i32_0 : i32, i32
  }
  func.func @transform_22(%arg0: i32) -> (i32, i32) {
    %c0_i32 = arith.constant 0 : i32
    %c0_i32_0 = arith.constant 0 : i32
    %c0_i32_1 = arith.constant 0 : i32
    return %c0_i32, %c0_i32_0 : i32, i32
  }
  func.func @transform_23(%arg0: i32) -> (i32, i32) {
    %c0_i32 = arith.constant 0 : i32
    %c0_i32_0 = arith.constant 0 : i32
    %c0_i32_1 = arith.constant 0 : i32
    return %c0_i32, %c0_i32_0 : i32, i32
  }
  func.func @transform_24(%arg0: i32) -> (i32, i32, i32) {
    %c0_i32 = arith.constant 0 : i32
    %c0_i32_0 = arith.constant 0 : i32
    %c0_i32_1 = arith.constant 0 : i32
    %c0_i32_2 = arith.constant 0 : i32
    return %c0_i32, %c0_i32_0, %c0_i32_1 : i32, i32, i32
  }
  func.func @transform_25(%arg0: i32) -> (i32, i32, i32) {
    %c0_i32 = arith.constant 0 : i32
    %c0_i32_0 = arith.constant 0 : i32
    %c0_i32_1 = arith.constant 0 : i32
    %c0_i32_2 = arith.constant 0 : i32
    return %c0_i32, %c0_i32_0, %c0_i32_1 : i32, i32, i32
  }
  func.func @transform_26(%arg0: i32) -> (i32, i32) {
    %c0_i32 = arith.constant 0 : i32
    %c0_i32_0 = arith.constant 0 : i32
    %c0_i32_1 = arith.constant 0 : i32
    return %c0_i32, %c0_i32_0 : i32, i32
  }
  func.func @transform_27(%arg0: i32) -> (i32, i32) {
    %c0_i32 = arith.constant 0 : i32
    %c0_i32_0 = arith.constant 0 : i32
    %c0_i32_1 = arith.constant 0 : i32
    return %c0_i32, %c0_i32_0 : i32, i32
  }
  func.func @transform_28(%arg0: i32) -> (i32, i32) {
    %c0_i32 = arith.constant 0 : i32
    %c0_i32_0 = arith.constant 0 : i32
    %c0_i32_1 = arith.constant 0 : i32
    return %c0_i32, %c0_i32_0 : i32, i32
  }
  func.func @transform_29(%arg0: i32) -> (i32, i32) {
    %c0_i32 = arith.constant 0 : i32
    %c0_i32_0 = arith.constant 0 : i32
    %c0_i32_1 = arith.constant 0 : i32
    return %c0_i32, %c0_i32_0 : i32, i32
  }
  func.func @transform_30(%arg0: i32) -> (i32, i32) {
    %c0_i32 = arith.constant 0 : i32
    %c0_i32_0 = arith.constant 0 : i32
    return %arg0, %c0_i32 : i32, i32
  }
}

</mosaic_0001>

<llo_original>
// kernel: decoder_layer_pallas.1
$region0: #{decoder_layer_pallas.1}
  #allocation0 [shape = 'u32[]', space=smem, size = 0x4, offset = 0x4, fixed_abs, tag = 'smem constant byte address 0x4 - core index']
  #allocation1 [shape = 'u32[72,128]{1,0:T(1,128)}', space=vmem, size = 0x9000, scoped, tag = 'internal scratch']
  %s0 = inlined_call_operand.smem [shape: u32[31], index: -1, kind: input, shape index: {}]
  %s1 = sld [smem:[%s0]]
  %s2 = scalar_lea.smem %s0, 1
  %s3 = sld [smem:[%s2]]
  %s4 = scalar_lea.smem %s0, 2
  %s5 = sld [smem:[%s4]]
  %s6 = scalar_lea.smem %s0, 3
  %s7 = sld [smem:[%s6]]
  %s8 = scalar_lea.smem %s0, 4
  %s9 = sld [smem:[%s8]]
  %s10 = scalar_lea.smem %s0, 5
  %s11 = sld [smem:[%s10]]
  %s12 = scalar_lea.smem %s0, 6
  %s13 = sld [smem:[%s12]]
  %s14 = scalar_lea.smem %s0, 7
  %s15 = sld [smem:[%s14]]
  %s16 = scalar_lea.smem %s0, 8
  %s17 = sld [smem:[%s16]]
  %s18 = scalar_lea.smem %s0, 9
  %s19 = sld [smem:[%s18]]
  %s20 = scalar_lea.smem %s0, 10
  %s21 = sld [smem:[%s20]]
  %s22 = scalar_lea.smem %s0, 11
  %s23 = sld [smem:[%s22]]
  %s24 = scalar_lea.smem %s0, 12
  %s25 = sld [smem:[%s24]]
  %s26 = scalar_lea.smem %s0, 13
  %s27 = sld [smem:[%s26]]
  %s28 = scalar_lea.smem %s0, 14
  %s29 = sld [smem:[%s28]]
  %s30 = scalar_lea.smem %s0, 15
  %s31 = sld [smem:[%s30]]
  %s32 = scalar_lea.smem %s0, 16
  %s33 = sld [smem:[%s32]]
  %s34 = scalar_lea.smem %s0, 17
  %s35 = sld [smem:[%s34]]
  %s36 = scalar_lea.smem %s0, 18
  %s37 = sld [smem:[%s36]]
  %s38 = scalar_lea.smem %s0, 19
  %s39 = sld [smem:[%s38]]
  %s40 = scalar_lea.smem %s0, 20
  %s41 = sld [smem:[%s40]]
  %s42 = scalar_lea.smem %s0, 21
  %s43 = sld [smem:[%s42]]
  %s44 = scalar_lea.smem %s0, 22
  %s45 = sld [smem:[%s44]]
  %s46 = scalar_lea.smem %s0, 23
  %s47 = sld [smem:[%s46]]
  %s48 = scalar_lea.smem %s0, 24
  %s49 = sld [smem:[%s48]]
  %s50 = scalar_lea.smem %s0, 25
  %s51 = sld [smem:[%s50]]
  %s52 = scalar_lea.smem %s0, 26
  %s53 = sld [smem:[%s52]]
  %s54 = scalar_lea.smem %s0, 27
  %s55 = sld [smem:[%s54]]
  %s56 = scalar_lea.smem %s0, 28
  %s57 = sld [smem:[%s56]]
  %s58 = scalar_lea.smem %s0, 29
  %s59 = sld [smem:[%s58]]
  %s60 = scalar_lea.smem %s0, 30
  %s61 = sld [smem:[%s60]]
  %s62 = sld [smem:[#allocation0]]
  $region153: #{decoder_layer_pallas.1} parent=0
    _
  %s64 = ssub.s32 1, %s62
  %s65 = scalar_select 0, %s64, %s62
  $region1: #{decoder_layer_pallas.1} parent=0
    #allocation2 [shape = 'u8[8192]{0}', space=vmem, size = 0x2000, scoped, tag = 'output window, operand 0']
    #allocation3 [shape = 's32[2]{0}', space=sflag, size = 0x8, scoped, tag = 'scoped memory for decoder_layer_pallas.1']
    %66 = vsyncpa [#allocation3], 0
    %s67 = scalar_lea.sflag [#allocation3], 1
    %68 = vsyncpa %s67, 0
    loop: start=0, step=1, limit=4
    $region2: #{decoder_layer_pallas.1} parent=1 // loop_pre_header
      _
    $region3: #{decoder_layer_pallas.1} parent=1 // loop_header
      %s70 = sphi 0, %s74
      %p71 = scmp.ge.s32.totalorder %s70, 4
      %s80 = sphi 0, %s82
      %s83 = sphi 0, %s80
      %s84 = sphi 0, %s83
      %s100 = sphi 0, %s84
      %s106 = sphi 0, %s108
      %s109 = sphi 0, %s106
      %s110 = sphi 0, %s109
      %s126 = sphi 0, %s110
      %s132 = sphi 0, %s134
      %s135 = sphi 0, %s132
      %s136 = sphi 0, %s135
      %s152 = sphi 0, %s136
      %s158 = sphi 0, %s160
      %s161 = sphi 0, %s158
      %s162 = sphi 0, %s161
      %s178 = sphi 0, %s162
      %s182 = sphi 0, %s182
      %s184 = sphi 0, %s182
      %s185 = sphi 0, %s184
      %s199 = sphi 0, %s185
      %s203 = sphi 0, %s203
      %s205 = sphi 0, %s203
      %s206 = sphi 0, %s205
      %s220 = sphi 0, %s206
      %s224 = sphi 0, %s224
      %s226 = sphi 0, %s224
      %s227 = sphi 0, %s226
      %s241 = sphi 0, %s227
      %s245 = sphi 0, %s245
      %s247 = sphi 0, %s245
      %s248 = sphi 0, %s247
      %s262 = sphi 0, %s248
      %s266 = sphi 0, %s266
      %s268 = sphi 0, %s266
      %s269 = sphi 0, %s268
      %s283 = sphi 0, %s269
      %s287 = sphi 0, %s287
      %s289 = sphi 0, %s287
      %s290 = sphi 0, %s289
      %s304 = sphi 0, %s290
      %s308 = sphi 0, %s308
      %s310 = sphi 0, %s308
      %s311 = sphi 0, %s310
      %s325 = sphi 0, %s311
      %s329 = sphi 0, %s329
      %s331 = sphi 0, %s329
      %s332 = sphi 0, %s331
      %s346 = sphi 0, %s332
      %s350 = sphi 0, %s350
      %s352 = sphi 0, %s350
      %s353 = sphi 0, %s352
      %s367 = sphi 0, %s353
      %s371 = sphi 0, %s371
      %s373 = sphi 0, %s371
      %s374 = sphi 0, %s373
      %s388 = sphi 0, %s374
      %s392 = sphi 0, %s392
      %s394 = sphi 0, %s392
      %s395 = sphi 0, %s394
      %s409 = sphi 0, %s395
      %s413 = sphi 0, %s413
      %s415 = sphi 0, %s413
      %s416 = sphi 0, %s415
      %s430 = sphi 0, %s416
      %s434 = sphi 0, %s434
      %s436 = sphi 0, %s434
      %s437 = sphi 0, %s436
      %s451 = sphi 0, %s437
      %s455 = sphi 0, %s455
      %s457 = sphi 0, %s455
      %s458 = sphi 0, %s457
      %s472 = sphi 0, %s458
      %s476 = sphi 0, %s476
      %s478 = sphi 0, %s476
      %s479 = sphi 0, %s478
      %s493 = sphi 0, %s479
      %s497 = sphi 0, %s497
      %s499 = sphi 0, %s497
      %s500 = sphi 0, %s499
      %s514 = sphi 0, %s500
      %s518 = sphi 0, %s518
      %s520 = sphi 0, %s518
      %s521 = sphi 0, %s520
      %s535 = sphi 0, %s521
      %s539 = sphi 0, %s539
      %s541 = sphi 0, %s539
      %s542 = sphi 0, %s541
      %s556 = sphi 0, %s542
      %s560 = sphi 0, %s560
      %s562 = sphi 0, %s560
      %s563 = sphi 0, %s562
      %s577 = sphi 0, %s563
      %s581 = sphi 0, %s581
      %s583 = sphi 0, %s581
      %s584 = sphi 0, %s583
      %s598 = sphi 0, %s584
      %s602 = sphi 0, %s602
      %s604 = sphi 0, %s602
      %s605 = sphi 0, %s604
      %s619 = sphi 0, %s605
      %s623 = sphi 0, %s623
      %s625 = sphi 0, %s623
      %s626 = sphi 0, %s625
      %s640 = sphi 0, %s626
      %s644 = sphi 0, %s644
      %s646 = sphi 0, %s644
      %s647 = sphi 0, %s646
      %s661 = sphi 0, %s647
      %s665 = sphi 0, %s665
      %s667 = sphi 0, %s665
      %s668 = sphi 0, %s667
      %s682 = sphi 0, %s668
      %s686 = sphi 0, %s686
      %s688 = sphi 0, %s686
      %s689 = sphi 0, %s688
      %s703 = sphi 0, %s689
      %s707 = sphi 0, %s707
      %s709 = sphi 0, %s707
      %s710 = sphi 0, %s709
      %s724 = sphi 0, %s710
      %s730 = sphi 0, %s732
      %s733 = sphi 0, %s730
      %s734 = sphi 0, %s733
      %s750 = sphi 0, %s734
    $region4: #{decoder_layer_pallas.1} parent=1 // loop_header_branch
      %73 = sbr.rel (%p71) target = $region8
    $region5: #{decoder_layer_pallas.1} parent=1 // loop_body
      %s75 = ssub.s32 %s70, 1
      %s76 = ssub.s32 %s70, 2
      %s77 = sadd.s32 %s70, 1
      %s78 = ssub.s32 %s70, %s77
      %p79 = scmp.eq.s32.totalorder %s78, 0
      %s81 = sadd.s32 %s80, 1
      %s82 = scalar_select %p79, %s80, %s81
      %p85 = pneg %p79
      %p86 = scmp.eq.s32.totalorder %s70, 1
      %p87 = por %p85, %p86
      %p88 = scmp.ne.s32.totalorder %s80, %s83
      %p89 = scmp.eq.s32.totalorder %s70, 0
      %p90 = por %p88, %p89
      %p91 = scmp.ne.s32.totalorder %s80, %s83
      %p92 = scmp.eq.s32.totalorder %s75, 1
      %p93 = por %p91, %p92
      %p94 = scmp.ne.s32.totalorder %s83, %s84
      %p95 = scmp.eq.s32.totalorder %s75, 0
      %p96 = por %p94, %p95
      %p97 = scmp.ne.s32.totalorder %s83, %s84
      %p98 = scmp.eq.s32.totalorder %s76, 1
      %p99 = por %p97, %p98
      %p101 = scmp.ne.s32.totalorder %s84, %s100
      %p102 = scmp.eq.s32.totalorder %s76, 0
      %p103 = por %p101, %p102
      %s104 = ssub.s32 %s70, %s77
      %p105 = scmp.eq.s32.totalorder %s104, 0
      %s107 = sadd.s32 %s106, 1
      %s108 = scalar_select %p105, %s106, %s107
      %p111 = pneg %p105
      %p112 = scmp.eq.s32.totalorder %s70, 1
      %p113 = por %p111, %p112
      %p114 = scmp.ne.s32.totalorder %s106, %s109
      %p115 = scmp.eq.s32.totalorder %s70, 0
      %p116 = por %p114, %p115
      %p117 = scmp.ne.s32.totalorder %s106, %s109
      %p118 = scmp.eq.s32.totalorder %s75, 1
      %p119 = por %p117, %p118
      %p120 = scmp.ne.s32.totalorder %s109, %s110
      %p121 = scmp.eq.s32.totalorder %s75, 0
      %p122 = por %p120, %p121
      %p123 = scmp.ne.s32.totalorder %s109, %s110
      %p124 = scmp.eq.s32.totalorder %s76, 1
      %p125 = por %p123, %p124
      %p127 = scmp.ne.s32.totalorder %s110, %s126
      %p128 = scmp.eq.s32.totalorder %s76, 0
      %p129 = por %p127, %p128
      %s130 = ssub.s32 %s70, %s77
      %p131 = scmp.eq.s32.totalorder %s130, 0
      %s133 = sadd.s32 %s132, 1
      %s134 = scalar_select %p131, %s132, %s133
      %p137 = pneg %p131
      %p138 = scmp.eq.s32.totalorder %s70, 1
      %p139 = por %p137, %p138
      %p140 = scmp.ne.s32.totalorder %s132, %s135
      %p141 = scmp.eq.s32.totalorder %s70, 0
      %p142 = por %p140, %p141
      %p143 = scmp.ne.s32.totalorder %s132, %s135
      %p144 = scmp.eq.s32.totalorder %s75, 1
      %p145 = por %p143, %p144
      %p146 = scmp.ne.s32.totalorder %s135, %s136
      %p147 = scmp.eq.s32.totalorder %s75, 0
      %p148 = por %p146, %p147
      %p149 = scmp.ne.s32.totalorder %s135, %s136
      %p150 = scmp.eq.s32.totalorder %s76, 1
      %p151 = por %p149, %p150
      %p153 = scmp.ne.s32.totalorder %s136, %s152
      %p154 = scmp.eq.s32.totalorder %s76, 0
      %p155 = por %p153, %p154
      %s156 = ssub.s32 %s70, %s77
      %p157 = scmp.eq.s32.totalorder %s156, 0
      %s159 = sadd.s32 %s158, 1
      %s160 = scalar_select %p157, %s158, %s159
      %p163 = pneg %p157
      %p164 = scmp.eq.s32.totalorder %s70, 1
      %p165 = por %p163, %p164
      %p166 = scmp.ne.s32.totalorder %s158, %s161
      %p167 = scmp.eq.s32.totalorder %s70, 0
      %p168 = por %p166, %p167
      %p169 = scmp.ne.s32.totalorder %s158, %s161
      %p170 = scmp.eq.s32.totalorder %s75, 1
      %p171 = por %p169, %p170
      %p172 = scmp.ne.s32.totalorder %s161, %s162
      %p173 = scmp.eq.s32.totalorder %s75, 0
      %p174 = por %p172, %p173
      %p175 = scmp.ne.s32.totalorder %s161, %s162
      %p176 = scmp.eq.s32.totalorder %s76, 1
      %p177 = por %p175, %p176
      %p179 = scmp.ne.s32.totalorder %s162, %s178
      %p180 = scmp.eq.s32.totalorder %s76, 0
      %p181 = por %p179, %p180
      %s183 = sadd.s32 %s182, 1
      %p186 = scmp.eq.s32.totalorder %s70, 1
      %p187 = scmp.ne.s32.totalorder %s182, %s184
      %p188 = scmp.eq.s32.totalorder %s70, 0
      %p189 = por %p187, %p188
      %p190 = scmp.ne.s32.totalorder %s182, %s184
      %p191 = scmp.eq.s32.totalorder %s75, 1
      %p192 = por %p190, %p191
      %p193 = scmp.ne.s32.totalorder %s184, %s185
      %p194 = scmp.eq.s32.totalorder %s75, 0
      %p195 = por %p193, %p194
      %p196 = scmp.ne.s32.totalorder %s184, %s185
      %p197 = scmp.eq.s32.totalorder %s76, 1
      %p198 = por %p196, %p197
      %p200 = scmp.ne.s32.totalorder %s185, %s199
      %p201 = scmp.eq.s32.totalorder %s76, 0
      %p202 = por %p200, %p201
      %s204 = sadd.s32 %s203, 1
      %p207 = scmp.eq.s32.totalorder %s70, 1
      %p208 = scmp.ne.s32.totalorder %s203, %s205
      %p209 = scmp.eq.s32.totalorder %s70, 0
      %p210 = por %p208, %p209
      %p211 = scmp.ne.s32.totalorder %s203, %s205
      %p212 = scmp.eq.s32.totalorder %s75, 1
      %p213 = por %p211, %p212
      %p214 = scmp.ne.s32.totalorder %s205, %s206
      %p215 = scmp.eq.s32.totalorder %s75, 0
      %p216 = por %p214, %p215
      %p217 = scmp.ne.s32.totalorder %s205, %s206
      %p218 = scmp.eq.s32.totalorder %s76, 1
      %p219 = por %p217, %p218
      %p221 = scmp.ne.s32.totalorder %s206, %s220
      %p222 = scmp.eq.s32.totalorder %s76, 0
      %p223 = por %p221, %p222
      %s225 = sadd.s32 %s224, 1
      %p228 = scmp.eq.s32.totalorder %s70, 1
      %p229 = scmp.ne.s32.totalorder %s224, %s226
      %p230 = scmp.eq.s32.totalorder %s70, 0
      %p231 = por %p229, %p230
      %p232 = scmp.ne.s32.totalorder %s224, %s226
      %p233 = scmp.eq.s32.totalorder %s75, 1
      %p234 = por %p232, %p233
      %p235 = scmp.ne.s32.totalorder %s226, %s227
      %p236 = scmp.eq.s32.totalorder %s75, 0
      %p237 = por %p235, %p236
      %p238 = scmp.ne.s32.totalorder %s226, %s227
      %p239 = scmp.eq.s32.totalorder %s76, 1
      %p240 = por %p238, %p239
      %p242 = scmp.ne.s32.totalorder %s227, %s241
      %p243 = scmp.eq.s32.totalorder %s76, 0
      %p244 = por %p242, %p243
      %s246 = sadd.s32 %s245, 1
      %p249 = scmp.eq.s32.totalorder %s70, 1
      %p250 = scmp.ne.s32.totalorder %s245, %s247
      %p251 = scmp.eq.s32.totalorder %s70, 0
      %p252 = por %p250, %p251
      %p253 = scmp.ne.s32.totalorder %s245, %s247
      %p254 = scmp.eq.s32.totalorder %s75, 1
      %p255 = por %p253, %p254
      %p256 = scmp.ne.s32.totalorder %s247, %s248
      %p257 = scmp.eq.s32.totalorder %s75, 0
      %p258 = por %p256, %p257
      %p259 = scmp.ne.s32.totalorder %s247, %s248
      %p260 = scmp.eq.s32.totalorder %s76, 1
      %p261 = por %p259, %p260
      %p263 = scmp.ne.s32.totalorder %s248, %s262
      %p264 = scmp.eq.s32.totalorder %s76, 0
      %p265 = por %p263, %p264
      %s267 = sadd.s32 %s266, 1
      %p270 = scmp.eq.s32.totalorder %s70, 1
      %p271 = scmp.ne.s32.totalorder %s266, %s268
      %p272 = scmp.eq.s32.totalorder %s70, 0
      %p273 = por %p271, %p272
      %p274 = scmp.ne.s32.totalorder %s266, %s268
      %p275 = scmp.eq.s32.totalorder %s75, 1
      %p276 = por %p274, %p275
      %p277 = scmp.ne.s32.totalorder %s268, %s269
      %p278 = scmp.eq.s32.totalorder %s75, 0
      %p279 = por %p277, %p278
      %p280 = scmp.ne.s32.totalorder %s268, %s269
      %p281 = scmp.eq.s32.totalorder %s76, 1
      %p282 = por %p280, %p281
      %p284 = scmp.ne.s32.totalorder %s269, %s283
      %p285 = scmp.eq.s32.totalorder %s76, 0
      %p286 = por %p284, %p285
      %s288 = sadd.s32 %s287, 1
      %p291 = scmp.eq.s32.totalorder %s70, 1
      %p292 = scmp.ne.s32.totalorder %s287, %s289
      %p293 = scmp.eq.s32.totalorder %s70, 0
      %p294 = por %p292, %p293
      %p295 = scmp.ne.s32.totalorder %s287, %s289
      %p296 = scmp.eq.s32.totalorder %s75, 1
      %p297 = por %p295, %p296
      %p298 = scmp.ne.s32.totalorder %s289, %s290
      %p299 = scmp.eq.s32.totalorder %s75, 0
      %p300 = por %p298, %p299
      %p301 = scmp.ne.s32.totalorder %s289, %s290
      %p302 = scmp.eq.s32.totalorder %s76, 1
      %p303 = por %p301, %p302
      %p305 = scmp.ne.s32.totalorder %s290, %s304
      %p306 = scmp.eq.s32.totalorder %s76, 0
      %p307 = por %p305, %p306
      %s309 = sadd.s32 %s308, 1
      %p312 = scmp.eq.s32.totalorder %s70, 1
      %p313 = scmp.ne.s32.totalorder %s308, %s310
      %p314 = scmp.eq.s32.totalorder %s70, 0
      %p315 = por %p313, %p314
      %p316 = scmp.ne.s32.totalorder %s308, %s310
      %p317 = scmp.eq.s32.totalorder %s75, 1
      %p318 = por %p316, %p317
      %p319 = scmp.ne.s32.totalorder %s310, %s311
      %p320 = scmp.eq.s32.totalorder %s75, 0
      %p321 = por %p319, %p320
      %p322 = scmp.ne.s32.totalorder %s310, %s311
      %p323 = scmp.eq.s32.totalorder %s76, 1
      %p324 = por %p322, %p323
      %p326 = scmp.ne.s32.totalorder %s311, %s325
      %p327 = scmp.eq.s32.totalorder %s76, 0
      %p328 = por %p326, %p327
      %s330 = sadd.s32 %s329, 1
      %p333 = scmp.eq.s32.totalorder %s70, 1
      %p334 = scmp.ne.s32.totalorder %s329, %s331
      %p335 = scmp.eq.s32.totalorder %s70, 0
      %p336 = por %p334, %p335
      %p337 = scmp.ne.s32.totalorder %s329, %s331
      %p338 = scmp.eq.s32.totalorder %s75, 1
      %p339 = por %p337, %p338
      %p340 = scmp.ne.s32.totalorder %s331, %s332
      %p341 = scmp.eq.s32.totalorder %s75, 0
      %p342 = por %p340, %p341
      %p343 = scmp.ne.s32.totalorder %s331, %s332
      %p344 = scmp.eq.s32.totalorder %s76, 1
      %p345 = por %p343, %p344
      %p347 = scmp.ne.s32.totalorder %s332, %s346
      %p348 = scmp.eq.s32.totalorder %s76, 0
      %p349 = por %p347, %p348
      %s351 = sadd.s32 %s350, 1
      %p354 = scmp.eq.s32.totalorder %s70, 1
      %p355 = scmp.ne.s32.totalorder %s350, %s352
      %p356 = scmp.eq.s32.totalorder %s70, 0
      %p357 = por %p355, %p356
      %p358 = scmp.ne.s32.totalorder %s350, %s352
      %p359 = scmp.eq.s32.totalorder %s75, 1
      %p360 = por %p358, %p359
      %p361 = scmp.ne.s32.totalorder %s352, %s353
      %p362 = scmp.eq.s32.totalorder %s75, 0
      %p363 = por %p361, %p362
      %p364 = scmp.ne.s32.totalorder %s352, %s353
      %p365 = scmp.eq.s32.totalorder %s76, 1
      %p366 = por %p364, %p365
      %p368 = scmp.ne.s32.totalorder %s353, %s367
      %p369 = scmp.eq.s32.totalorder %s76, 0
      %p370 = por %p368, %p369
      %s372 = sadd.s32 %s371, 1
      %p375 = scmp.eq.s32.totalorder %s70, 1
      %p376 = scmp.ne.s32.totalorder %s371, %s373
      %p377 = scmp.eq.s32.totalorder %s70, 0
      %p378 = por %p376, %p377
      %p379 = scmp.ne.s32.totalorder %s371, %s373
      %p380 = scmp.eq.s32.totalorder %s75, 1
      %p381 = por %p379, %p380
      %p382 = scmp.ne.s32.totalorder %s373, %s374
      %p383 = scmp.eq.s32.totalorder %s75, 0
      %p384 = por %p382, %p383
      %p385 = scmp.ne.s32.totalorder %s373, %s374
      %p386 = scmp.eq.s32.totalorder %s76, 1
      %p387 = por %p385, %p386
      %p389 = scmp.ne.s32.totalorder %s374, %s388
      %p390 = scmp.eq.s32.totalorder %s76, 0
      %p391 = por %p389, %p390
      %s393 = sadd.s32 %s392, 1
      %p396 = scmp.eq.s32.totalorder %s70, 1
      %p397 = scmp.ne.s32.totalorder %s392, %s394
      %p398 = scmp.eq.s32.totalorder %s70, 0
      %p399 = por %p397, %p398
      %p400 = scmp.ne.s32.totalorder %s392, %s394
      %p401 = scmp.eq.s32.totalorder %s75, 1
      %p402 = por %p400, %p401
      %p403 = scmp.ne.s32.totalorder %s394, %s395
      %p404 = scmp.eq.s32.totalorder %s75, 0
      %p405 = por %p403, %p404
      %p406 = scmp.ne.s32.totalorder %s394, %s395
      %p407 = scmp.eq.s32.totalorder %s76, 1
      %p408 = por %p406, %p407
      %p410 = scmp.ne.s32.totalorder %s395, %s409
      %p411 = scmp.eq.s32.totalorder %s76, 0
      %p412 = por %p410, %p411
      %s414 = sadd.s32 %s413, 1
      %p417 = scmp.eq.s32.totalorder %s70, 1
      %p418 = scmp.ne.s32.totalorder %s413, %s415
      %p419 = scmp.eq.s32.totalorder %s70, 0
      %p420 = por %p418, %p419
      %p421 = scmp.ne.s32.totalorder %s413, %s415
      %p422 = scmp.eq.s32.totalorder %s75, 1
      %p423 = por %p421, %p422
      %p424 = scmp.ne.s32.totalorder %s415, %s416
      %p425 = scmp.eq.s32.totalorder %s75, 0
      %p426 = por %p424, %p425
      %p427 = scmp.ne.s32.totalorder %s415, %s416
      %p428 = scmp.eq.s32.totalorder %s76, 1
      %p429 = por %p427, %p428
      %p431 = scmp.ne.s32.totalorder %s416, %s430
      %p432 = scmp.eq.s32.totalorder %s76, 0
      %p433 = por %p431, %p432
      %s435 = sadd.s32 %s434, 1
      %p438 = scmp.eq.s32.totalorder %s70, 1
      %p439 = scmp.ne.s32.totalorder %s434, %s436
      %p440 = scmp.eq.s32.totalorder %s70, 0
      %p441 = por %p439, %p440
      %p442 = scmp.ne.s32.totalorder %s434, %s436
      %p443 = scmp.eq.s32.totalorder %s75, 1
      %p444 = por %p442, %p443
      %p445 = scmp.ne.s32.totalorder %s436, %s437
      %p446 = scmp.eq.s32.totalorder %s75, 0
      %p447 = por %p445, %p446
      %p448 = scmp.ne.s32.totalorder %s436, %s437
      %p449 = scmp.eq.s32.totalorder %s76, 1
      %p450 = por %p448, %p449
      %p452 = scmp.ne.s32.totalorder %s437, %s451
      %p453 = scmp.eq.s32.totalorder %s76, 0
      %p454 = por %p452, %p453
      %s456 = sadd.s32 %s455, 1
      %p459 = scmp.eq.s32.totalorder %s70, 1
      %p460 = scmp.ne.s32.totalorder %s455, %s457
      %p461 = scmp.eq.s32.totalorder %s70, 0
      %p462 = por %p460, %p461
      %p463 = scmp.ne.s32.totalorder %s455, %s457
      %p464 = scmp.eq.s32.totalorder %s75, 1
      %p465 = por %p463, %p464
      %p466 = scmp.ne.s32.totalorder %s457, %s458
      %p467 = scmp.eq.s32.totalorder %s75, 0
      %p468 = por %p466, %p467
      %p469 = scmp.ne.s32.totalorder %s457, %s458
      %p470 = scmp.eq.s32.totalorder %s76, 1
      %p471 = por %p469, %p470
      %p473 = scmp.ne.s32.totalorder %s458, %s472
      %p474 = scmp.eq.s32.totalorder %s76, 0
      %p475 = por %p473, %p474
      %s477 = sadd.s32 %s476, 1
      %p480 = scmp.eq.s32.totalorder %s70, 1
      %p481 = scmp.ne.s32.totalorder %s476, %s478
      %p482 = scmp.eq.s32.totalorder %s70, 0
      %p483 = por %p481, %p482
      %p484 = scmp.ne.s32.totalorder %s476, %s478
      %p485 = scmp.eq.s32.totalorder %s75, 1
      %p486 = por %p484, %p485
      %p487 = scmp.ne.s32.totalorder %s478, %s479
      %p488 = scmp.eq.s32.totalorder %s75, 0
      %p489 = por %p487, %p488
      %p490 = scmp.ne.s32.totalorder %s478, %s479
      %p491 = scmp.eq.s32.totalorder %s76, 1
      %p492 = por %p490, %p491
      %p494 = scmp.ne.s32.totalorder %s479, %s493
      %p495 = scmp.eq.s32.totalorder %s76, 0
      %p496 = por %p494, %p495
      %s498 = sadd.s32 %s497, 1
      %p501 = scmp.eq.s32.totalorder %s70, 1
      %p502 = scmp.ne.s32.totalorder %s497, %s499
      %p503 = scmp.eq.s32.totalorder %s70, 0
      %p504 = por %p502, %p503
      %p505 = scmp.ne.s32.totalorder %s497, %s499
      %p506 = scmp.eq.s32.totalorder %s75, 1
      %p507 = por %p505, %p506
      %p508 = scmp.ne.s32.totalorder %s499, %s500
      %p509 = scmp.eq.s32.totalorder %s75, 0
      %p510 = por %p508, %p509
      %p511 = scmp.ne.s32.totalorder %s499, %s500
      %p512 = scmp.eq.s32.totalorder %s76, 1
      %p513 = por %p511, %p512
      %p515 = scmp.ne.s32.totalorder %s500, %s514
      %p516 = scmp.eq.s32.totalorder %s76, 0
      %p517 = por %p515, %p516
      %s519 = sadd.s32 %s518, 1
      %p522 = scmp.eq.s32.totalorder %s70, 1
      %p523 = scmp.ne.s32.totalorder %s518, %s520
      %p524 = scmp.eq.s32.totalorder %s70, 0
      %p525 = por %p523, %p524
      %p526 = scmp.ne.s32.totalorder %s518, %s520
      %p527 = scmp.eq.s32.totalorder %s75, 1
      %p528 = por %p526, %p527
      %p529 = scmp.ne.s32.totalorder %s520, %s521
      %p530 = scmp.eq.s32.totalorder %s75, 0
      %p531 = por %p529, %p530
      %p532 = scmp.ne.s32.totalorder %s520, %s521
      %p533 = scmp.eq.s32.totalorder %s76, 1
      %p534 = por %p532, %p533
      %p536 = scmp.ne.s32.totalorder %s521, %s535
      %p537 = scmp.eq.s32.totalorder %s76, 0
      %p538 = por %p536, %p537
      %s540 = sadd.s32 %s539, 1
      %p543 = scmp.eq.s32.totalorder %s70, 1
      %p544 = scmp.ne.s32.totalorder %s539, %s541
      %p545 = scmp.eq.s32.totalorder %s70, 0
      %p546 = por %p544, %p545
      %p547 = scmp.ne.s32.totalorder %s539, %s541
      %p548 = scmp.eq.s32.totalorder %s75, 1
      %p549 = por %p547, %p548
      %p550 = scmp.ne.s32.totalorder %s541, %s542
      %p551 = scmp.eq.s32.totalorder %s75, 0
      %p552 = por %p550, %p551
      %p553 = scmp.ne.s32.totalorder %s541, %s542
      %p554 = scmp.eq.s32.totalorder %s76, 1
      %p555 = por %p553, %p554
      %p557 = scmp.ne.s32.totalorder %s542, %s556
      %p558 = scmp.eq.s32.totalorder %s76, 0
      %p559 = por %p557, %p558
      %s561 = sadd.s32 %s560, 1
      %p564 = scmp.eq.s32.totalorder %s70, 1
      %p565 = scmp.ne.s32.totalorder %s560, %s562
      %p566 = scmp.eq.s32.totalorder %s70, 0
      %p567 = por %p565, %p566
      %p568 = scmp.ne.s32.totalorder %s560, %s562
      %p569 = scmp.eq.s32.totalorder %s75, 1
      %p570 = por %p568, %p569
      %p571 = scmp.ne.s32.totalorder %s562, %s563
      %p572 = scmp.eq.s32.totalorder %s75, 0
      %p573 = por %p571, %p572
      %p574 = scmp.ne.s32.totalorder %s562, %s563
      %p575 = scmp.eq.s32.totalorder %s76, 1
      %p576 = por %p574, %p575
      %p578 = scmp.ne.s32.totalorder %s563, %s577
      %p579 = scmp.eq.s32.totalorder %s76, 0
      %p580 = por %p578, %p579
      %s582 = sadd.s32 %s581, 1
      %p585 = scmp.eq.s32.totalorder %s70, 1
      %p586 = scmp.ne.s32.totalorder %s581, %s583
      %p587 = scmp.eq.s32.totalorder %s70, 0
      %p588 = por %p586, %p587
      %p589 = scmp.ne.s32.totalorder %s581, %s583
      %p590 = scmp.eq.s32.totalorder %s75, 1
      %p591 = por %p589, %p590
      %p592 = scmp.ne.s32.totalorder %s583, %s584
      %p593 = scmp.eq.s32.totalorder %s75, 0
      %p594 = por %p592, %p593
      %p595 = scmp.ne.s32.totalorder %s583, %s584
      %p596 = scmp.eq.s32.totalorder %s76, 1
      %p597 = por %p595, %p596
      %p599 = scmp.ne.s32.totalorder %s584, %s598
      %p600 = scmp.eq.s32.totalorder %s76, 0
      %p601 = por %p599, %p600
      %s603 = sadd.s32 %s602, 1
      %p606 = scmp.eq.s32.totalorder %s70, 1
      %p607 = scmp.ne.s32.totalorder %s602, %s604
      %p608 = scmp.eq.s32.totalorder %s70, 0
      %p609 = por %p607, %p608
      %p610 = scmp.ne.s32.totalorder %s602, %s604
      %p611 = scmp.eq.s32.totalorder %s75, 1
      %p612 = por %p610, %p611
      %p613 = scmp.ne.s32.totalorder %s604, %s605
      %p614 = scmp.eq.s32.totalorder %s75, 0
      %p615 = por %p613, %p614
      %p616 = scmp.ne.s32.totalorder %s604, %s605
      %p617 = scmp.eq.s32.totalorder %s76, 1
      %p618 = por %p616, %p617
      %p620 = scmp.ne.s32.totalorder %s605, %s619
      %p621 = scmp.eq.s32.totalorder %s76, 0
      %p622 = por %p620, %p621
      %s624 = sadd.s32 %s623, 1
      %p627 = scmp.eq.s32.totalorder %s70, 1
      %p628 = scmp.ne.s32.totalorder %s623, %s625
      %p629 = scmp.eq.s32.totalorder %s70, 0
      %p630 = por %p628, %p629
      %p631 = scmp.ne.s32.totalorder %s623, %s625
      %p632 = scmp.eq.s32.totalorder %s75, 1
      %p633 = por %p631, %p632
      %p634 = scmp.ne.s32.totalorder %s625, %s626
      %p635 = scmp.eq.s32.totalorder %s75, 0
      %p636 = por %p634, %p635
      %p637 = scmp.ne.s32.totalorder %s625, %s626
      %p638 = scmp.eq.s32.totalorder %s76, 1
      %p639 = por %p637, %p638
      %p641 = scmp.ne.s32.totalorder %s626, %s640
      %p642 = scmp.eq.s32.totalorder %s76, 0
      %p643 = por %p641, %p642
      %s645 = sadd.s32 %s644, 1
      %p648 = scmp.eq.s32.totalorder %s70, 1
      %p649 = scmp.ne.s32.totalorder %s644, %s646
      %p650 = scmp.eq.s32.totalorder %s70, 0
      %p651 = por %p649, %p650
      %p652 = scmp.ne.s32.totalorder %s644, %s646
      %p653 = scmp.eq.s32.totalorder %s75, 1
      %p654 = por %p652, %p653
      %p655 = scmp.ne.s32.totalorder %s646, %s647
      %p656 = scmp.eq.s32.totalorder %s75, 0
      %p657 = por %p655, %p656
      %p658 = scmp.ne.s32.totalorder %s646, %s647
      %p659 = scmp.eq.s32.totalorder %s76, 1
      %p660 = por %p658, %p659
      %p662 = scmp.ne.s32.totalorder %s647, %s661
      %p663 = scmp.eq.s32.totalorder %s76, 0
      %p664 = por %p662, %p663
      %s666 = sadd.s32 %s665, 1
      %p669 = scmp.eq.s32.totalorder %s70, 1
      %p670 = scmp.ne.s32.totalorder %s665, %s667
      %p671 = scmp.eq.s32.totalorder %s70, 0
      %p672 = por %p670, %p671
      %p673 = scmp.ne.s32.totalorder %s665, %s667
      %p674 = scmp.eq.s32.totalorder %s75, 1
      %p675 = por %p673, %p674
      %p676 = scmp.ne.s32.totalorder %s667, %s668
      %p677 = scmp.eq.s32.totalorder %s75, 0
      %p678 = por %p676, %p677
      %p679 = scmp.ne.s32.totalorder %s667, %s668
      %p680 = scmp.eq.s32.totalorder %s76, 1
      %p681 = por %p679, %p680
      %p683 = scmp.ne.s32.totalorder %s668, %s682
      %p684 = scmp.eq.s32.totalorder %s76, 0
      %p685 = por %p683, %p684
      %s687 = sadd.s32 %s686, 1
      %p690 = scmp.eq.s32.totalorder %s70, 1
      %p691 = scmp.ne.s32.totalorder %s686, %s688
      %p692 = scmp.eq.s32.totalorder %s70, 0
      %p693 = por %p691, %p692
      %p694 = scmp.ne.s32.totalorder %s686, %s688
      %p695 = scmp.eq.s32.totalorder %s75, 1
      %p696 = por %p694, %p695
      %p697 = scmp.ne.s32.totalorder %s688, %s689
      %p698 = scmp.eq.s32.totalorder %s75, 0
      %p699 = por %p697, %p698
      %p700 = scmp.ne.s32.totalorder %s688, %s689
      %p701 = scmp.eq.s32.totalorder %s76, 1
      %p702 = por %p700, %p701
      %p704 = scmp.ne.s32.totalorder %s689, %s703
      %p705 = scmp.eq.s32.totalorder %s76, 0
      %p706 = por %p704, %p705
      %s708 = sadd.s32 %s707, 1
      %p711 = scmp.eq.s32.totalorder %s70, 1
      %p712 = scmp.ne.s32.totalorder %s707, %s709
      %p713 = scmp.eq.s32.totalorder %s70, 0
      %p714 = por %p712, %p713
      %p715 = scmp.ne.s32.totalorder %s707, %s709
      %p716 = scmp.eq.s32.totalorder %s75, 1
      %p717 = por %p715, %p716
      %p718 = scmp.ne.s32.totalorder %s709, %s710
      %p719 = scmp.eq.s32.totalorder %s75, 0
      %p720 = por %p718, %p719
      %p721 = scmp.ne.s32.totalorder %s709, %s710
      %p722 = scmp.eq.s32.totalorder %s76, 1
      %p723 = por %p721, %p722
      %p725 = scmp.ne.s32.totalorder %s710, %s724
      %p726 = scmp.eq.s32.totalorder %s76, 0
      %p727 = por %p725, %p726
      %s728 = ssub.s32 %s70, %s77
      %p729 = scmp.eq.s32.totalorder %s728, 0
      %s731 = sadd.s32 %s730, 1
      %s732 = scalar_select %p729, %s730, %s731
      %p735 = pneg %p729
      %p736 = scmp.eq.s32.totalorder %s70, 1
      %p737 = por %p735, %p736
      %p738 = scmp.ne.s32.totalorder %s730, %s733
      %p739 = scmp.eq.s32.totalorder %s70, 0
      %p740 = por %p738, %p739
      %p741 = scmp.ne.s32.totalorder %s730, %s733
      %p742 = scmp.eq.s32.totalorder %s75, 1
      %p743 = por %p741, %p742
      %p744 = scmp.ne.s32.totalorder %s733, %s734
      %p745 = scmp.eq.s32.totalorder %s75, 0
      %p746 = por %p744, %p745
      %p747 = scmp.ne.s32.totalorder %s733, %s734
      %p748 = scmp.eq.s32.totalorder %s76, 1
      %p749 = por %p747, %p748
      %p751 = scmp.ne.s32.totalorder %s734, %s750
      %p752 = scmp.eq.s32.totalorder %s76, 0
      %p753 = por %p751, %p752
      %p754 = scmp.le.s32.totalorder 1, %s70
      %p755 = scmp.lt.s32.totalorder %s70, 3
      %p756 = pnand %p754, %p755
      %p757 = pneg %p756
      // Predicated region
      $region9: #{decoder_layer_pallas.1} parent=5 // pred_check
        _
      $region10: #{decoder_layer_pallas.1} parent=5 // pred_check_branch
        %759 = sbr.rel (%p756) target = $region12
      $region11: #{decoder_layer_pallas.1} parent=5 // pred_region
        %s760 = ssub.s32 %s70, 1
        // Predicated region
        $region13: #{decoder_layer_pallas.1} parent=11 // pred_check
          %p761 = pneg %p195
        $region14: #{decoder_layer_pallas.1} parent=11 // pred_check_branch
          %763 = sbr.rel (%p761) target = $region16
        $region15: #{decoder_layer_pallas.1} parent=11 // pred_region
          _
        $region16: #{decoder_layer_pallas.1} parent=11 // pred_fallthru
          _
        // Predicated region
        $region17: #{decoder_layer_pallas.1} parent=11 // pred_check
          %p764 = pneg %p216
        $region18: #{decoder_layer_pallas.1} parent=11 // pred_check_branch
          %766 = sbr.rel (%p764) target = $region20
        $region19: #{decoder_layer_pallas.1} parent=11 // pred_region
          _
        $region20: #{decoder_layer_pallas.1} parent=11 // pred_fallthru
          _
        // Predicated region
        $region21: #{decoder_layer_pallas.1} parent=11 // pred_check
          %p767 = pneg %p237
        $region22: #{decoder_layer_pallas.1} parent=11 // pred_check_branch
          %769 = sbr.rel (%p767) target = $region24
        $region23: #{decoder_layer_pallas.1} parent=11 // pred_region
          _
        $region24: #{decoder_layer_pallas.1} parent=11 // pred_fallthru
          _
        // Predicated region
        $region25: #{decoder_layer_pallas.1} parent=11 // pred_check
          %p770 = pneg %p258
        $region26: #{decoder_layer_pallas.1} parent=11 // pred_check_branch
          %772 = sbr.rel (%p770) target = $region28
        $region27: #{decoder_layer_pallas.1} parent=11 // pred_region
          _
        $region28: #{decoder_layer_pallas.1} parent=11 // pred_fallthru
          _
        // Predicated region
        $region29: #{decoder_layer_pallas.1} parent=11 // pred_check
          %p773 = pneg %p279
        $region30: #{decoder_layer_pallas.1} parent=11 // pred_check_branch
          %775 = sbr.rel (%p773) target = $region32
        $region31: #{decoder_layer_pallas.1} parent=11 // pred_region
          _
        $region32: #{decoder_layer_pallas.1} parent=11 // pred_fallthru
          _
        // Predicated region
        $region33: #{decoder_layer_pallas.1} parent=11 // pred_check
          %p776 = pneg %p300
        $region34: #{decoder_layer_pallas.1} parent=11 // pred_check_branch
          %778 = sbr.rel (%p776) target = $region36
        $region35: #{decoder_layer_pallas.1} parent=11 // pred_region
          _
        $region36: #{decoder_layer_pallas.1} parent=11 // pred_fallthru
          _
        // Predicated region
        $region37: #{decoder_layer_pallas.1} parent=11 // pred_check
          %p779 = pneg %p321
        $region38: #{decoder_layer_pallas.1} parent=11 // pred_check_branch
          %781 = sbr.rel (%p779) target = $region40
        $region39: #{decoder_layer_pallas.1} parent=11 // pred_region
          _
        $region40: #{decoder_layer_pallas.1} parent=11 // pred_fallthru
          _
        // Predicated region
        $region41: #{decoder_layer_pallas.1} parent=11 // pred_check
          %p782 = pneg %p342
        $region42: #{decoder_layer_pallas.1} parent=11 // pred_check_branch
          %784 = sbr.rel (%p782) target = $region44
        $region43: #{decoder_layer_pallas.1} parent=11 // pred_region
          _
        $region44: #{decoder_layer_pallas.1} parent=11 // pred_fallthru
          _
        // Predicated region
        $region45: #{decoder_layer_pallas.1} parent=11 // pred_check
          %p785 = pneg %p363
        $region46: #{decoder_layer_pallas.1} parent=11 // pred_check_branch
          %787 = sbr.rel (%p785) target = $region48
        $region47: #{decoder_layer_pallas.1} parent=11 // pred_region
          _
        $region48: #{decoder_layer_pallas.1} parent=11 // pred_fallthru
          _
        // Predicated region
        $region49: #{decoder_layer_pallas.1} parent=11 // pred_check
          %p788 = pneg %p384
        $region50: #{decoder_layer_pallas.1} parent=11 // pred_check_branch
          %790 = sbr.rel (%p788) target = $region52
        $region51: #{decoder_layer_pallas.1} parent=11 // pred_region
          _
        $region52: #{decoder_layer_pallas.1} parent=11 // pred_fallthru
          _
        // Predicated region
        $region53: #{decoder_layer_pallas.1} parent=11 // pred_check
          %p791 = pneg %p405
        $region54: #{decoder_layer_pallas.1} parent=11 // pred_check_branch
          %793 = sbr.rel (%p791) target = $region56
        $region55: #{decoder_layer_pallas.1} parent=11 // pred_region
          _
        $region56: #{decoder_layer_pallas.1} parent=11 // pred_fallthru
          _
        // Predicated region
        $region57: #{decoder_layer_pallas.1} parent=11 // pred_check
          %p794 = pneg %p426
        $region58: #{decoder_layer_pallas.1} parent=11 // pred_check_branch
          %796 = sbr.rel (%p794) target = $region60
        $region59: #{decoder_layer_pallas.1} parent=11 // pred_region
          _
        $region60: #{decoder_layer_pallas.1} parent=11 // pred_fallthru
          _
        // Predicated region
        $region61: #{decoder_layer_pallas.1} parent=11 // pred_check
          %p797 = pneg %p447
        $region62: #{decoder_layer_pallas.1} parent=11 // pred_check_branch
          %799 = sbr.rel (%p797) target = $region64
        $region63: #{decoder_layer_pallas.1} parent=11 // pred_region
          _
        $region64: #{decoder_layer_pallas.1} parent=11 // pred_fallthru
          _
        // Predicated region
        $region65: #{decoder_layer_pallas.1} parent=11 // pred_check
          %p800 = pneg %p468
        $region66: #{decoder_layer_pallas.1} parent=11 // pred_check_branch
          %802 = sbr.rel (%p800) target = $region68
        $region67: #{decoder_layer_pallas.1} parent=11 // pred_region
          _
        $region68: #{decoder_layer_pallas.1} parent=11 // pred_fallthru
          _
        // Predicated region
        $region69: #{decoder_layer_pallas.1} parent=11 // pred_check
          %p803 = pneg %p489
        $region70: #{decoder_layer_pallas.1} parent=11 // pred_check_branch
          %805 = sbr.rel (%p803) target = $region72
        $region71: #{decoder_layer_pallas.1} parent=11 // pred_region
          _
        $region72: #{decoder_layer_pallas.1} parent=11 // pred_fallthru
          _
        // Predicated region
        $region73: #{decoder_layer_pallas.1} parent=11 // pred_check
          %p806 = pneg %p510
        $region74: #{decoder_layer_pallas.1} parent=11 // pred_check_branch
          %808 = sbr.rel (%p806) target = $region76
        $region75: #{decoder_layer_pallas.1} parent=11 // pred_region
          _
        $region76: #{decoder_layer_pallas.1} parent=11 // pred_fallthru
          _
        // Predicated region
        $region77: #{decoder_layer_pallas.1} parent=11 // pred_check
          %p809 = pneg %p531
        $region78: #{decoder_layer_pallas.1} parent=11 // pred_check_branch
          %811 = sbr.rel (%p809) target = $region80
        $region79: #{decoder_layer_pallas.1} parent=11 // pred_region
          _
        $region80: #{decoder_layer_pallas.1} parent=11 // pred_fallthru
          _
        // Predicated region
        $region81: #{decoder_layer_pallas.1} parent=11 // pred_check
          %p812 = pneg %p552
        $region82: #{decoder_layer_pallas.1} parent=11 // pred_check_branch
          %814 = sbr.rel (%p812) target = $region84
        $region83: #{decoder_layer_pallas.1} parent=11 // pred_region
          _
        $region84: #{decoder_layer_pallas.1} parent=11 // pred_fallthru
          _
        // Predicated region
        $region85: #{decoder_layer_pallas.1} parent=11 // pred_check
          %p815 = pneg %p573
        $region86: #{decoder_layer_pallas.1} parent=11 // pred_check_branch
          %817 = sbr.rel (%p815) target = $region88
        $region87: #{decoder_layer_pallas.1} parent=11 // pred_region
          _
        $region88: #{decoder_layer_pallas.1} parent=11 // pred_fallthru
          _
        // Predicated region
        $region89: #{decoder_layer_pallas.1} parent=11 // pred_check
          %p818 = pneg %p594
        $region90: #{decoder_layer_pallas.1} parent=11 // pred_check_branch
          %820 = sbr.rel (%p818) target = $region92
        $region91: #{decoder_layer_pallas.1} parent=11 // pred_region
          _
        $region92: #{decoder_layer_pallas.1} parent=11 // pred_fallthru
          _
        // Predicated region
        $region93: #{decoder_layer_pallas.1} parent=11 // pred_check
          %p821 = pneg %p615
        $region94: #{decoder_layer_pallas.1} parent=11 // pred_check_branch
          %823 = sbr.rel (%p821) target = $region96
        $region95: #{decoder_layer_pallas.1} parent=11 // pred_region
          _
        $region96: #{decoder_layer_pallas.1} parent=11 // pred_fallthru
          _
        // Predicated region
        $region97: #{decoder_layer_pallas.1} parent=11 // pred_check
          %p824 = pneg %p636
        $region98: #{decoder_layer_pallas.1} parent=11 // pred_check_branch
          %826 = sbr.rel (%p824) target = $region100
        $region99: #{decoder_layer_pallas.1} parent=11 // pred_region
          _
        $region100: #{decoder_layer_pallas.1} parent=11 // pred_fallthru
          _
        // Predicated region
        $region101: #{decoder_layer_pallas.1} parent=11 // pred_check
          %p827 = pneg %p657
        $region102: #{decoder_layer_pallas.1} parent=11 // pred_check_branch
          %829 = sbr.rel (%p827) target = $region104
        $region103: #{decoder_layer_pallas.1} parent=11 // pred_region
          _
        $region104: #{decoder_layer_pallas.1} parent=11 // pred_fallthru
          _
        // Predicated region
        $region105: #{decoder_layer_pallas.1} parent=11 // pred_check
          %p830 = pneg %p678
        $region106: #{decoder_layer_pallas.1} parent=11 // pred_check_branch
          %832 = sbr.rel (%p830) target = $region108
        $region107: #{decoder_layer_pallas.1} parent=11 // pred_region
          _
        $region108: #{decoder_layer_pallas.1} parent=11 // pred_fallthru
          _
        // Predicated region
        $region109: #{decoder_layer_pallas.1} parent=11 // pred_check
          %p833 = pneg %p699
        $region110: #{decoder_layer_pallas.1} parent=11 // pred_check_branch
          %835 = sbr.rel (%p833) target = $region112
        $region111: #{decoder_layer_pallas.1} parent=11 // pred_region
          _
        $region112: #{decoder_layer_pallas.1} parent=11 // pred_fallthru
          _
        // Predicated region
        $region113: #{decoder_layer_pallas.1} parent=11 // pred_check
          %p836 = pneg %p720
        $region114: #{decoder_layer_pallas.1} parent=11 // pred_check_branch
          %838 = sbr.rel (%p836) target = $region116
        $region115: #{decoder_layer_pallas.1} parent=11 // pred_region
          _
        $region116: #{decoder_layer_pallas.1} parent=11 // pred_fallthru
          _
      $region12: #{decoder_layer_pallas.1} parent=5 // pred_fallthru
        _
      %p839 = scmp.lt.s32.totalorder %s70, 2
      // Predicated region
      $region117: #{decoder_layer_pallas.1} parent=5 // pred_check
        %p840 = pneg %p839
      $region118: #{decoder_layer_pallas.1} parent=5 // pred_check_branch
        %842 = sbr.rel (%p840) target = $region120
      $region119: #{decoder_layer_pallas.1} parent=5 // pred_region
        // Predicated region
        $region121: #{decoder_layer_pallas.1} parent=119 // pred_check
          %p843 = pneg %p90
        $region122: #{decoder_layer_pallas.1} parent=119 // pred_check_branch
          %845 = sbr.rel (%p843) target = $region124
        $region123: #{decoder_layer_pallas.1} parent=119 // pred_region
          %p846 = scmp.lt.s32.totalorder %s70, 1
          %s847 = scalar_select %p846, %s70, 1
          %s848 = smul.addr %s847, 8
          %s849 = scalar_lea.vmem %s1, %s848
        $region124: #{decoder_layer_pallas.1} parent=119 // pred_fallthru
          _
        // Predicated region
        $region125: #{decoder_layer_pallas.1} parent=119 // pred_check
          %p850 = pneg %p116
        $region126: #{decoder_layer_pallas.1} parent=119 // pred_check_branch
          %852 = sbr.rel (%p850) target = $region128
        $region127: #{decoder_layer_pallas.1} parent=119 // pred_region
          %s853 = smul.u32 2, %s70
          %p854 = scmp.lt.s32.totalorder %s853, 3
          %s855 = scalar_select %p854, %s853, 3
          %s856 = smul.addr %s855, 8
          %s857 = scalar_lea.vmem %s3, %s856
          %s858 = smul.u32 2, %s70
        $region128: #{decoder_layer_pallas.1} parent=119 // pred_fallthru
          _
        // Predicated region
        $region129: #{decoder_layer_pallas.1} parent=119 // pred_check
          %p859 = pneg %p142
        $region130: #{decoder_layer_pallas.1} parent=119 // pred_check_branch
          %861 = sbr.rel (%p859) target = $region132
        $region131: #{decoder_layer_pallas.1} parent=119 // pred_region
          %p862 = scmp.lt.s32.totalorder %s70, 1
          %s863 = scalar_select %p862, %s70, 1
          %s864 = smul.addr %s863, 8
          %s865 = scalar_lea.vmem %s5, %s864
        $region132: #{decoder_layer_pallas.1} parent=119 // pred_fallthru
          _
        // Predicated region
        $region133: #{decoder_layer_pallas.1} parent=119 // pred_check
          %p866 = pneg %p168
        $region134: #{decoder_layer_pallas.1} parent=119 // pred_check_branch
          %868 = sbr.rel (%p866) target = $region136
        $region135: #{decoder_layer_pallas.1} parent=119 // pred_region
          %p869 = scmp.lt.s32.totalorder %s70, 1
          %s870 = scalar_select %p869, %s70, 1
          %s871 = smul.addr %s870, 8
          %s872 = scalar_lea.vmem %s7, %s871
        $region136: #{decoder_layer_pallas.1} parent=119 // pred_fallthru
          _
      $region120: #{decoder_layer_pallas.1} parent=5 // pred_fallthru
        _
      %p873 = scmp.le.s32.totalorder 1, %s70
      %p874 = scmp.lt.s32.totalorder %s70, 3
      %p875 = pnand %p873, %p874
      %p876 = pneg %p875
      // Predicated region
      $region137: #{decoder_layer_pallas.1} parent=5 // pred_check
        _
      $region138: #{decoder_layer_pallas.1} parent=5 // pred_check_branch
        %878 = sbr.rel (%p875) target = $region140
      $region139: #{decoder_layer_pallas.1} parent=5 // pred_region
        %s879 = ssub.s32 %s70, 1
        %p880 = scmp.lt.s32.totalorder %s75, 1
        %s881 = scalar_select %p880, %s75, 1
        %s882 = smul.addr %s881, 8
        %s883 = scalar_lea.vmem %s1, %s882
        %p884 = pneg %p96
        %p885 = pneg %p93
        %s886 = smul.u32 2, %s75
        %p887 = scmp.lt.s32.totalorder %s886, 3
        %s888 = scalar_select %p887, %s886, 3
        %s889 = smul.addr %s888, 8
        %s890 = scalar_lea.vmem %s3, %s889
        %p891 = pneg %p122
        %p892 = pneg %p119
        %p893 = scmp.lt.s32.totalorder %s75, 1
        %s894 = scalar_select %p893, %s75, 1
        %s895 = smul.addr %s894, 8
        %s896 = scalar_lea.vmem %s5, %s895
        %p897 = pneg %p148
        %p898 = pneg %p145
        %p899 = scmp.lt.s32.totalorder %s75, 1
        %s900 = scalar_select %p899, %s75, 1
        %s901 = smul.addr %s900, 8
        %s902 = scalar_lea.vmem %s7, %s901
        %p903 = pneg %p174
        %p904 = pneg %p171
        %p905 = pneg %p195
        %p906 = pneg %p192
        %p907 = pneg %p216
        %p908 = pneg %p213
        %p909 = pneg %p237
        %p910 = pneg %p234
        %p911 = pneg %p258
        %p912 = pneg %p255
        %p913 = pneg %p279
        %p914 = pneg %p276
        %p915 = pneg %p300
        %p916 = pneg %p297
        %p917 = pneg %p321
        %p918 = pneg %p318
        %p919 = pneg %p342
        %p920 = pneg %p339
        %p921 = pneg %p363
        %p922 = pneg %p360
        %p923 = pneg %p384
        %p924 = pneg %p381
        %p925 = pneg %p405
        %p926 = pneg %p402
        %p927 = pneg %p426
        %p928 = pneg %p423
        %p929 = pneg %p447
        %p930 = pneg %p444
        %p931 = pneg %p468
        %p932 = pneg %p465
        %p933 = pneg %p489
        %p934 = pneg %p486
        %p935 = pneg %p510
        %p936 = pneg %p507
        %p937 = pneg %p531
        %p938 = pneg %p528
        %p939 = pneg %p552
        %p940 = pneg %p549
        %p941 = pneg %p573
        %p942 = pneg %p570
        %p943 = pneg %p594
        %p944 = pneg %p591
        %p945 = pneg %p615
        %p946 = pneg %p612
        %p947 = pneg %p636
        %p948 = pneg %p633
        %p949 = pneg %p657
        %p950 = pneg %p654
        %p951 = pneg %p678
        %p952 = pneg %p675
        %p953 = pneg %p699
        %p954 = pneg %p696
        %p955 = pneg %p720
        %p956 = pneg %p717
        %p957 = pneg %p746
        %p958 = pneg %p743
        %s959 = sand.u32 %s733, 1
        %s960 = scalar_lea.sflag [#allocation3], %s959
        %s961 = sand.u32 %s733, 1
        %s962 = smul.addr %s961, 8
        %s963 = scalar_lea.vmem [#allocation2], %s962
        %p964 = scmp.lt.s32.totalorder %s75, 1
        %s965 = scalar_select %p964, %s75, 1
        %s966 = smul.addr %s965, 8
        %s967 = scalar_lea.vmem %s1, %s966
        %s968 = smul.u32 2, %s75
        %p969 = scmp.lt.s32.totalorder %s968, 3
        %s970 = scalar_select %p969, %s968, 3
        %s971 = smul.addr %s970, 8
        %s972 = scalar_lea.vmem %s3, %s971
        %s973 = smul.u32 2, %s75
        %p974 = scmp.lt.s32.totalorder %s75, 1
        %s975 = scalar_select %p974, %s75, 1
        %s976 = smul.addr %s975, 8
        %s977 = scalar_lea.vmem %s5, %s976
        %p978 = scmp.lt.s32.totalorder %s75, 1
        %s979 = scalar_select %p978, %s75, 1
        %s980 = smul.addr %s979, 8
        %s981 = scalar_lea.vmem %s7, %s980
        %v982 = vld [vmem:[%s17] sm:$0xff]
        %v983 = vld [vmem:[%s17 + $0x8] sm:$0xff]
        %v984 = vld [vmem:[%s17 + $0x10] sm:$0xff]
        %v985 = vld [vmem:[%s17 + $0x18] sm:$0xff]
        %v986 = vld [vmem:[%s19] sm:$0xff]
        %v987 = vld [vmem:[%s967] sm:$0xff]
        %v988 = vld [vmem:[%s972] sm:$0xff]
        %v989 = vld [vmem:[%s972 + $0x8] sm:$0xff]
        %v990 = vld [vmem:[%s21] sm:$0xff]
        %v991 = vld [vmem:[%s21 + $0x8] sm:$0xff]
        %v992 = vld [vmem:[%s21 + $0x10] sm:$0xff]
        %v993 = vld [vmem:[%s21 + $0x18] sm:$0xff]
        %v994 = vld [vmem:[%s23] sm:$0x1]
        %v996 = vperm.slane %v994, 0
        %vm998 = vcmask 261120
        %v1000 = vsel %vm998, %v987, 0
        %1002 = vmatpush.msra.mxu0 0.0
        %1003 = vmatpush.msra.mxu0 0.0
        %1004 = vmatpush.msra.mxu0 0.0
        %1005 = vmatpush.msra.mxu0 0.0
        %1006 = vmatpush.msra.mxu0 0.0
        %1007 = vmatpush.msra.mxu0 0.0
        %1008 = vmatpush.msra.mxu0 0.0
        %1009 = vmatpush.msra.mxu0 0.0
        %1010 = vmatpush.msra.mxu0 0.0
        %1011 = vmatpush.msra.mxu0 0.0
        %1012 = vmatpush.msra.mxu0 0.0
        %1013 = vmatpush.msra.mxu0 0.0
        %1014 = vmatpush.msra.mxu0 %v993
        %1015 = vmatpush.msra.mxu0 %v992
        %1016 = vmatpush.msra.mxu0 %v991
        %1017 = vmatpush.msra.mxu0 %v990
        %1018 = vmatmul.f32.gmra.mxu0 %v1000
        %v1019 = vpop.f32.mrf.mxu0
        %v1020 = vadd.f32 %v996, %v1019
        %1021 = vdwg.mxu0
        %v1022 = vld [vmem:[%s25] sm:$0xff]
        %v1023 = vld [vmem:[%s25 + $0x8] sm:$0xff]
        %v1024 = vld [vmem:[%s25 + $0x10] sm:$0xff]
        %v1025 = vld [vmem:[%s25 + $0x18] sm:$0xff]
        %v1026 = vld [vmem:[%s27] sm:$0xff]
        %v1027 = vld [vmem:[%s27 + $0x8] sm:$0xff]
        %v1028 = vld [vmem:[%s27 + $0x10] sm:$0xff]
        %v1029 = vld [vmem:[%s27 + $0x18] sm:$0xff]
        %1031 = vset.pattern.permute.xlu0 0
        %1032 = vperm.xlu0 %1031, %v1026
        %v1033 = vpop.permute.xlu0 %1032
        %1036 = vset.pattern.permute.xlu0 0
        %1037 = vperm.xlu0 %1036, %v1027
        %v1038 = vpop.permute.xlu0 %1037
        %1041 = vset.pattern.permute.xlu0 0
        %1042 = vperm.xlu0 %1041, %v1028
        %v1043 = vpop.permute.xlu0 %1042
        %1046 = vset.pattern.permute.xlu0 0
        %1047 = vperm.xlu0 %1046, %v1029
        %v1048 = vpop.permute.xlu0 %1047
        %v1051 = vsel %vm998, %v1022, 0
        %v1054 = vsel %vm998, %v1023, 0
        %v1057 = vsel %vm998, %v1024, 0
        %v1060 = vsel %vm998, %v1025, 0
        %1062 = vmatpush.xpose.msra.mxu0 0.0
        %1063 = vmatpush.xpose.msra.mxu0 0.0
        %1064 = vmatpush.xpose.msra.mxu0 0.0
        %1065 = vmatpush.xpose.msra.mxu0 0.0
        %1066 = vmatpush.xpose.msra.mxu0 0.0
        %1067 = vmatpush.xpose.msra.mxu0 0.0
        %1068 = vmatpush.xpose.msra.mxu0 0.0
        %1069 = vmatpush.xpose.msra.mxu0 0.0
        %1070 = vmatpush.xpose.msra.mxu0 0.0
        %1071 = vmatpush.xpose.msra.mxu0 0.0
        %1072 = vmatpush.xpose.msra.mxu0 0.0
        %1073 = vmatpush.xpose.msra.mxu0 0.0
        %1074 = vmatpush.xpose.msra.mxu0 0.0
        %1075 = vmatpush.xpose.msra.mxu0 0.0
        %1076 = vmatpush.xpose.msra.mxu0 0.0
        %1077 = vmatpush.xpose.msra.mxu0 %v1000
        %1078 = vmatmul.f32.gmra.mxu0 %v1051
        %v1079 = vpop.f32.mrf.mxu0
        %v1080 = vadd.f32 %v1033, %v1079
        %1081 = vmatmul.f32.gmra.mxu0 %v1054
        %v1082 = vpop.f32.mrf.mxu0
        %v1083 = vadd.f32 %v1038, %v1082
        %1084 = vmatmul.f32.gmra.mxu0 %v1057
        %v1085 = vpop.f32.mrf.mxu0
        %v1086 = vadd.f32 %v1043, %v1085
        %1087 = vmatmul.f32.gmra.mxu0 %v1060
        %v1088 = vpop.f32.mrf.mxu0
        %v1089 = vadd.f32 %v1048, %v1088
        %1090 = vdwg.mxu0
        %v1091 = vld [vmem:[%s9] sm:$0xff]
        %v1092 = vld [vmem:[%s9 + $0x8] sm:$0xff]
        %v1093 = vld [vmem:[%s9 + $0x10] sm:$0xff]
        %v1094 = vld [vmem:[%s9 + $0x18] sm:$0xff]
        %v1095 = vld [vmem:[%s13] sm:$0xff]
        %v1096 = vld [vmem:[%s13 + $0x8] sm:$0xff]
        %v1097 = vld [vmem:[%s13 + $0x10] sm:$0xff]
        %v1098 = vld [vmem:[%s13 + $0x18] sm:$0xff]
        %v1099 = vld [vmem:[%s977] sm:$0xff]
        %v1100 = vld [vmem:[%s29] sm:$0xff]
        %v1101 = vld [vmem:[%s29 + $0x8] sm:$0xff]
        %v1102 = vld [vmem:[%s29 + $0x10] sm:$0xff]
        %v1103 = vld [vmem:[%s29 + $0x18] sm:$0xff]
        %v1104 = vld [vmem:[%s31] sm:$0x1]
        %1109 = vrot.lane.b32.xlu0 %v1080, 8
        %v1110 = vpop.permute.xlu0 %1109
        %1111 = vrot.lane.b32.xlu0 %v1083, 8
        %v1112 = vpop.permute.xlu0 %1111
        %1113 = vrot.lane.b32.xlu0 %v1086, 8
        %v1114 = vpop.permute.xlu0 %1113
        %1115 = vrot.lane.b32.xlu0 %v1089, 8
        %v1116 = vpop.permute.xlu0 %1115
        %1121 = vrot.lane.b32.xlu0 %v1080, 16
        %v1122 = vpop.permute.xlu0 %1121
        %1123 = vrot.lane.b32.xlu0 %v1083, 16
        %v1124 = vpop.permute.xlu0 %1123
        %1125 = vrot.lane.b32.xlu0 %v1086, 16
        %v1126 = vpop.permute.xlu0 %1125
        %1127 = vrot.lane.b32.xlu0 %v1089, 16
        %v1128 = vpop.permute.xlu0 %1127
        %1133 = vrot.lane.b32.xlu0 %v1080, 24
        %v1134 = vpop.permute.xlu0 %1133
        %1135 = vrot.lane.b32.xlu0 %v1083, 24
        %v1136 = vpop.permute.xlu0 %1135
        %1137 = vrot.lane.b32.xlu0 %v1086, 24
        %v1138 = vpop.permute.xlu0 %1137
        %1139 = vrot.lane.b32.xlu0 %v1089, 24
        %v1140 = vpop.permute.xlu0 %1139
        %vm1145 = vcmask 64512
        %v1146 = vsel %vm1145, %v1080, %v1110
        %v1147 = vsel %vm1145, %v1083, %v1112
        %v1148 = vsel %vm1145, %v1086, %v1114
        %v1149 = vsel %vm1145, %v1089, %v1116
        %vm1150 = vcmask 130048
        %v1151 = vsel %vm1150, %v1146, %v1122
        %v1152 = vsel %vm1150, %v1147, %v1124
        %v1153 = vsel %vm1150, %v1148, %v1126
        %v1154 = vsel %vm1150, %v1149, %v1128
        %vm1155 = vcmask 195584
        %v1156 = vsel %vm1155, %v1151, %v1134
        %v1157 = vsel %vm1155, %v1152, %v1136
        %v1158 = vsel %vm1155, %v1153, %v1138
        %v1159 = vsel %vm1155, %v1154, %v1140
        %v1160 = vmul.f32 %v1156, %v1091
        %v1161 = vmul.f32 %v1157, %v1092
        %v1162 = vmul.f32 %v1158, %v1093
        %v1163 = vmul.f32 %v1159, %v1094
        %v1165 = vsel %vm998, %v1020, 0
        %1167 = vmatpush.msra.mxu0 0.0
        %1168 = vmatpush.msra.mxu0 0.0
        %1169 = vmatpush.msra.mxu0 0.0
        %1170 = vmatpush.msra.mxu0 0.0
        %1171 = vmatpush.msra.mxu0 0.0
        %1172 = vmatpush.msra.mxu0 0.0
        %1173 = vmatpush.msra.mxu0 0.0
        %1174 = vmatpush.msra.mxu0 0.0
        %1175 = vmatpush.msra.mxu0 0.0
        %1176 = vmatpush.msra.mxu0 0.0
        %1177 = vmatpush.msra.mxu0 0.0
        %1178 = vmatpush.msra.mxu0 0.0
        %1179 = vmatpush.msra.mxu0 %v1163
        %1180 = vmatpush.msra.mxu0 %v1162
        %1181 = vmatpush.msra.mxu0 %v1161
        %1182 = vmatpush.msra.mxu0 %v1160
        %1183 = vmatmul.f32.gmra.mxu0 %v1165
        %v1184 = vpop.f32.mrf.mxu0
        %v1185 = vadd.f32 0.0, %v1184
        %1186 = vdwg.mxu0
        %vm1187 = vcmp.eq.f32.partialorder %v1099, 0.0
        %v1188 = vsel %vm1187, -1e+09, %v1185
        %v1189 = vsel %vm998, %v1188, -inf
        %v1190 = vrot.slane %v1189, 4
        %v1191 = vmax.f32 %v1189, %v1190
        %v1192 = vrot.slane %v1191, 2
        %v1193 = vmax.f32 %v1191, %v1192
        %v1194 = vrot.slane %v1193, 1
        %v1195 = vmax.f32 %v1193, %v1194
        %v1196 = vsub.f32 %v1188, %v1195
        %v1197 = vmul.f32 %v1196, 1.442695
        %v1198 = vpow.pop %v1197
        %v1199 = vsel %vm998, %v1198, 0.0
        %v1200 = vrot.slane %v1199, 4
        %v1201 = vadd.f32 %v1199, %v1200
        %v1202 = vrot.slane %v1201, 2
        %v1203 = vadd.f32 %v1201, %v1202
        %v1204 = vrot.slane %v1203, 1
        %v1205 = vadd.f32 %v1203, %v1204
        %v1206 = vrcp.pop %v1205
        %v1207 = vmul.f32 %v1205, %v1206
        %v1208 = vsub.f32 2.0, %v1207
        %v1209 = vmul.f32 %v1206, %v1208
        %v1210 = vmul.f32 %v1198, %v1209
        %1211 = vrot.lane.b32.xlu0 %v1020, 120
        %v1212 = vpop.permute.xlu0 %1211
        %1213 = vrot.lane.b32.xlu0 %v1020, 112
        %v1214 = vpop.permute.xlu0 %1213
        %1215 = vrot.lane.b32.xlu0 %v1020, 104
        %v1216 = vpop.permute.xlu0 %1215
        %v1217 = vmul.f32 %v1210, %v1095
        %v1218 = vmul.f32 %v1210, %v1096
        %v1219 = vmul.f32 %v1210, %v1097
        %v1220 = vmul.f32 %v1210, %v1098
        %1221 = vrot.lane.b32.xlu0 %v1020, 96
        %v1222 = vpop.permute.xlu0 %1221
        %1223 = vrot.lane.b32.xlu0 %v1212, 96
        %v1224 = vpop.permute.xlu0 %1223
        %1225 = vrot.lane.b32.xlu0 %v1214, 96
        %v1226 = vpop.permute.xlu0 %1225
        %1227 = vrot.lane.b32.xlu0 %v1216, 96
        %v1228 = vpop.permute.xlu0 %1227
        %v1234 = vsel %vm998, %v1217, 0
        %v1237 = vsel %vm998, %v1218, 0
        %v1240 = vsel %vm998, %v1219, 0
        %v1243 = vsel %vm998, %v1220, 0
        %1245 = vmatpush.msra.mxu0 0.0
        %1246 = vmatpush.msra.mxu0 0.0
        %1247 = vmatpush.msra.mxu0 0.0
        %1248 = vmatpush.msra.mxu0 0.0
        %1249 = vmatpush.msra.mxu0 0.0
        %1250 = vmatpush.msra.mxu0 0.0
        %1251 = vmatpush.msra.mxu0 0.0
        %1252 = vmatpush.msra.mxu0 0.0
        %1253 = vmatpush.msra.mxu0 0.0
        %1254 = vmatpush.msra.mxu0 0.0
        %1255 = vmatpush.msra.mxu0 0.0
        %1256 = vmatpush.msra.mxu0 0.0
        %1257 = vmatpush.msra.mxu0 %v1228
        %1258 = vmatpush.msra.mxu0 %v1226
        %1259 = vmatpush.msra.mxu0 %v1224
        %1260 = vmatpush.msra.mxu0 %v1222
        %1261 = vmatmul.f32.gmra.mxu0 %v1234
        %v1262 = vpop.f32.mrf.mxu0
        %v1263 = vadd.f32 0.0, %v1262
        %1264 = vmatmul.f32.gmra.mxu0 %v1237
        %v1265 = vpop.f32.mrf.mxu0
        %v1266 = vadd.f32 0.0, %v1265
        %1267 = vmatmul.f32.gmra.mxu0 %v1240
        %v1268 = vpop.f32.mrf.mxu0
        %v1269 = vadd.f32 0.0, %v1268
        %1270 = vmatmul.f32.gmra.mxu0 %v1243
        %v1271 = vpop.f32.mrf.mxu0
        %v1272 = vadd.f32 0.0, %v1271
        %1273 = vdwg.mxu0
        %1278 = vrot.lane.b32.xlu0 %v1263, 8
        %v1279 = vpop.permute.xlu0 %1278
        %1280 = vrot.lane.b32.xlu0 %v1266, 8
        %v1281 = vpop.permute.xlu0 %1280
        %1282 = vrot.lane.b32.xlu0 %v1269, 8
        %v1283 = vpop.permute.xlu0 %1282
        %1284 = vrot.lane.b32.xlu0 %v1272, 8
        %v1285 = vpop.permute.xlu0 %1284
        %1290 = vrot.lane.b32.xlu0 %v1263, 16
        %v1291 = vpop.permute.xlu0 %1290
        %1292 = vrot.lane.b32.xlu0 %v1266, 16
        %v1293 = vpop.permute.xlu0 %1292
        %1294 = vrot.lane.b32.xlu0 %v1269, 16
        %v1295 = vpop.permute.xlu0 %1294
        %1296 = vrot.lane.b32.xlu0 %v1272, 16
        %v1297 = vpop.permute.xlu0 %1296
        %1302 = vrot.lane.b32.xlu0 %v1263, 24
        %v1303 = vpop.permute.xlu0 %1302
        %1304 = vrot.lane.b32.xlu0 %v1266, 24
        %v1305 = vpop.permute.xlu0 %1304
        %1306 = vrot.lane.b32.xlu0 %v1269, 24
        %v1307 = vpop.permute.xlu0 %1306
        %1308 = vrot.lane.b32.xlu0 %v1272, 24
        %v1309 = vpop.permute.xlu0 %1308
        %v1314 = vsel %vm1145, %v1263, %v1279
        %v1315 = vsel %vm1145, %v1266, %v1281
        %v1316 = vsel %vm1145, %v1269, %v1283
        %v1317 = vsel %vm1145, %v1272, %v1285
        %v1318 = vsel %vm1150, %v1314, %v1291
        %v1319 = vsel %vm1150, %v1315, %v1293
        %v1320 = vsel %vm1150, %v1316, %v1295
        %v1321 = vsel %vm1150, %v1317, %v1297
        %v1322 = vsel %vm1155, %v1318, %v1303
        %v1323 = vsel %vm1155, %v1319, %v1305
        %v1324 = vsel %vm1155, %v1320, %v1307
        %v1325 = vsel %vm1155, %v1321, %v1309
        %v1326 = vmul.f32 %v1322, %v982
        %v1327 = vmul.f32 %v1323, %v983
        %v1328 = vmul.f32 %v1324, %v984
        %v1329 = vmul.f32 %v1325, %v985
        %v1331 = vsel %vm998, %v1326, 0
        %v1334 = vsel %vm998, %v1327, 0
        %v1337 = vsel %vm998, %v1328, 0
        %v1340 = vsel %vm998, %v1329, 0
        %1342 = vmatpush.msra.mxu0 0.0
        %1343 = vmatpush.msra.mxu0 0.0
        %1344 = vmatpush.msra.mxu0 0.0
        %1345 = vmatpush.msra.mxu0 0.0
        %1346 = vmatpush.msra.mxu0 0.0
        %1347 = vmatpush.msra.mxu0 0.0
        %1348 = vmatpush.msra.mxu0 0.0
        %1349 = vmatpush.msra.mxu0 0.0
        %1350 = vmatpush.msra.mxu0 0.0
        %1351 = vmatpush.msra.mxu0 0.0
        %1352 = vmatpush.msra.mxu0 0.0
        %1353 = vmatpush.msra.mxu0 0.0
        %1354 = vmatpush.msra.mxu0 %v1103
        %1355 = vmatpush.msra.mxu0 %v1102
        %1356 = vmatpush.msra.mxu0 %v1101
        %1357 = vmatpush.msra.mxu0 %v1100
        %1358 = vmatmul.f32.gmra.mxu0 %v1331
        %v1359 = vpop.f32.mrf.mxu0
        %v1360 = vadd.f32 0.0, %v1359
        %1361 = vmatmul.f32.gmra.mxu0 %v1334
        %v1362 = vpop.f32.mrf.mxu0
        %v1363 = vadd.f32 0.0, %v1362
        %1364 = vmatmul.f32.gmra.mxu0 %v1337
        %v1365 = vpop.f32.mrf.mxu0
        %v1366 = vadd.f32 0.0, %v1365
        %1367 = vmatmul.f32.gmra.mxu0 %v1340
        %v1368 = vpop.f32.mrf.mxu0
        %v1369 = vadd.f32 0.0, %v1368
        %1370 = vdwg.mxu0
        %v1372 = vperm.slane %v1104, 0
        %v1375 = vsel %vm998, %v986, 0
        %1377 = vmatpush.msra.mxu0 0.0
        %1378 = vmatpush.msra.mxu0 0.0
        %1379 = vmatpush.msra.mxu0 0.0
        %1380 = vmatpush.msra.mxu0 0.0
        %1381 = vmatpush.msra.mxu0 0.0
        %1382 = vmatpush.msra.mxu0 0.0
        %1383 = vmatpush.msra.mxu0 0.0
        %1384 = vmatpush.msra.mxu0 0.0
        %1385 = vmatpush.msra.mxu0 0.0
        %1386 = vmatpush.msra.mxu0 0.0
        %1387 = vmatpush.msra.mxu0 0.0
        %1388 = vmatpush.msra.mxu0 0.0
        %1389 = vmatpush.msra.mxu0 %v1369
        %1390 = vmatpush.msra.mxu0 %v1366
        %1391 = vmatpush.msra.mxu0 %v1363
        %1392 = vmatpush.msra.mxu0 %v1360
        %1393 = vmatmul.f32.gmra.mxu0 %v1375
        %v1394 = vpop.f32.mrf.mxu0
        %v1395 = vadd.f32 %v1372, %v1394
        %1396 = vdwg.mxu0
        %v1397 = vadd.f32 %v987, %v1395
        %v1398 = vld [vmem:[%s49] sm:$0x1]
        %v1399 = vld [vmem:[%s51] sm:$0x1]
        %v1400 = vsel %vm998, %v1397, 0.0
        %1401 = vadd.xlane.f32.xlu0 %v1400
        %v1402 = vpop.xlane.xlu0 %1401
        %v1403 = vrcp.pop 32.0
        %v1404 = vmul.f32 32.0, %v1403
        %v1405 = vsub.f32 1.0, %v1404
        %v1406 = vmul.f32 %v1403, %v1405
        %v1407 = vadd.f32 %v1403, %v1406
        %vm1408 = vweird.f32 %v1403
        %v1409 = vsel %vm1408, %v1403, %v1407
        %v1410 = vmul.f32 %v1402, %v1409
        %v1411 = vsub.f32 %v1397, %v1410
        %v1412 = vmul.f32 %v1411, %v1411
        %v1413 = vsel %vm998, %v1412, 0.0
        %1414 = vadd.xlane.f32.xlu0 %v1413
        %v1415 = vpop.xlane.xlu0 %1414
        %v1416 = vmul.f32 %v1415, %v1409
        %v1417 = vadd.f32 %v1416, 1e-05
        %v1418 = vrsqrt.pop %v1417
        %v1419 = vmul.f32 %v1418, %v1417
        %v1420 = vmul.f32 %v1419, %v1418
        %v1421 = vmul.f32 0.5, %v1420
        %v1422 = vsub.f32 1.5, %v1421
        %v1423 = vmul.f32 %v1418, %v1422
        %vm1424 = vweird.f32 %v1417
        %vm1425 = vweird.f32 %v1418
        %vm1426 = vmor %vm1424, %vm1425
        %v1427 = vsel %vm1426, %v1418, %v1423
        %v1428 = vmul.f32 %v1411, %v1427
        %v1430 = vperm.slane %v1398, 0
        %v1432 = vmul.f32 %v1428, %v1430
        %v1434 = vperm.slane %v1399, 0
        %v1436 = vadd.f32 %v1432, %v1434
        %v1437 = vld [vmem:[%s33] sm:$0xff]
        %v1438 = vld [vmem:[%s33 + $0x8] sm:$0xff]
        %v1439 = vld [vmem:[%s33 + $0x10] sm:$0xff]
        %v1440 = vld [vmem:[%s33 + $0x18] sm:$0xff]
        %v1441 = vld [vmem:[%s35] sm:$0x1]
        %v1443 = vperm.slane %v1441, 0
        %v1446 = vsel %vm998, %v1436, 0
        %1448 = vmatpush.msra.mxu0 0.0
        %1449 = vmatpush.msra.mxu0 0.0
        %1450 = vmatpush.msra.mxu0 0.0
        %1451 = vmatpush.msra.mxu0 0.0
        %1452 = vmatpush.msra.mxu0 0.0
        %1453 = vmatpush.msra.mxu0 0.0
        %1454 = vmatpush.msra.mxu0 0.0
        %1455 = vmatpush.msra.mxu0 0.0
        %1456 = vmatpush.msra.mxu0 0.0
        %1457 = vmatpush.msra.mxu0 0.0
        %1458 = vmatpush.msra.mxu0 0.0
        %1459 = vmatpush.msra.mxu0 0.0
        %1460 = vmatpush.msra.mxu0 %v1440
        %1461 = vmatpush.msra.mxu0 %v1439
        %1462 = vmatpush.msra.mxu0 %v1438
        %1463 = vmatpush.msra.mxu0 %v1437
        %1464 = vmatmul.f32.gmra.mxu0 %v1446
        %v1465 = vpop.f32.mrf.mxu0
        %v1466 = vadd.f32 %v1443, %v1465
        %1467 = vdwg.mxu0
        %v1468 = vld [vmem:[%s37] sm:$0xff]
        %v1469 = vld [vmem:[%s37 + $0x8] sm:$0xff]
        %v1470 = vld [vmem:[%s37 + $0x10] sm:$0xff]
        %v1471 = vld [vmem:[%s37 + $0x18] sm:$0xff]
        %v1472 = vld [vmem:[%s39] sm:$0xff]
        %v1473 = vld [vmem:[%s39 + $0x8] sm:$0xff]
        %v1474 = vld [vmem:[%s39 + $0x10] sm:$0xff]
        %v1475 = vld [vmem:[%s39 + $0x18] sm:$0xff]
        %1477 = vset.pattern.permute.xlu0 0
        %1478 = vperm.xlu0 %1477, %v1472
        %v1479 = vpop.permute.xlu0 %1478
        %1482 = vset.pattern.permute.xlu0 0
        %1483 = vperm.xlu0 %1482, %v1473
        %v1484 = vpop.permute.xlu0 %1483
        %1487 = vset.pattern.permute.xlu0 0
        %1488 = vperm.xlu0 %1487, %v1474
        %v1489 = vpop.permute.xlu0 %1488
        %1492 = vset.pattern.permute.xlu0 0
        %1493 = vperm.xlu0 %1492, %v1475
        %v1494 = vpop.permute.xlu0 %1493
        %v1497 = vsel %vm998, %v1468, 0
        %v1500 = vsel %vm998, %v1469, 0
        %v1503 = vsel %vm998, %v1470, 0
        %v1506 = vsel %vm998, %v1471, 0
        %v1509 = vsel %vm998, %v988, 0
        %v1512 = vsel %vm998, %v989, 0
        %1514 = vmatpush.xpose.msra.mxu0 0.0
        %1515 = vmatpush.xpose.msra.mxu0 0.0
        %1516 = vmatpush.xpose.msra.mxu0 0.0
        %1517 = vmatpush.xpose.msra.mxu0 0.0
        %1518 = vmatpush.xpose.msra.mxu0 0.0
        %1519 = vmatpush.xpose.msra.mxu0 0.0
        %1520 = vmatpush.xpose.msra.mxu0 0.0
        %1521 = vmatpush.xpose.msra.mxu0 0.0
        %1522 = vmatpush.xpose.msra.mxu0 0.0
        %1523 = vmatpush.xpose.msra.mxu0 0.0
        %1524 = vmatpush.xpose.msra.mxu0 0.0
        %1525 = vmatpush.xpose.msra.mxu0 0.0
        %1526 = vmatpush.xpose.msra.mxu0 0.0
        %1527 = vmatpush.xpose.msra.mxu0 0.0
        %1528 = vmatpush.xpose.msra.mxu0 %v1512
        %1529 = vmatpush.xpose.msra.mxu0 %v1509
        %1530 = vmatmul.f32.gmra.mxu0 %v1497
        %v1531 = vpop.f32.mrf.mxu0
        %v1532 = vadd.f32 %v1479, %v1531
        %1533 = vmatmul.f32.gmra.mxu0 %v1500
        %v1534 = vpop.f32.mrf.mxu0
        %v1535 = vadd.f32 %v1484, %v1534
        %1536 = vmatmul.f32.gmra.mxu0 %v1503
        %v1537 = vpop.f32.mrf.mxu0
        %v1538 = vadd.f32 %v1489, %v1537
        %1539 = vmatmul.f32.gmra.mxu0 %v1506
        %v1540 = vpop.f32.mrf.mxu0
        %v1541 = vadd.f32 %v1494, %v1540
        %1542 = vdwg.mxu0
        %v1543 = vld [vmem:[%s41] sm:$0xff]
        %v1544 = vld [vmem:[%s41 + $0x8] sm:$0xff]
        %v1545 = vld [vmem:[%s41 + $0x10] sm:$0xff]
        %v1546 = vld [vmem:[%s41 + $0x18] sm:$0xff]
        %v1547 = vld [vmem:[%s43] sm:$0x1]
        %v1549 = vperm.slane %v1547, 0
        %1551 = vmatpush.msra.mxu0 0.0
        %1552 = vmatpush.msra.mxu0 0.0
        %1553 = vmatpush.msra.mxu0 0.0
        %1554 = vmatpush.msra.mxu0 0.0
        %1555 = vmatpush.msra.mxu0 0.0
        %1556 = vmatpush.msra.mxu0 0.0
        %1557 = vmatpush.msra.mxu0 0.0
        %1558 = vmatpush.msra.mxu0 0.0
        %1559 = vmatpush.msra.mxu0 0.0
        %1560 = vmatpush.msra.mxu0 0.0
        %1561 = vmatpush.msra.mxu0 0.0
        %1562 = vmatpush.msra.mxu0 0.0
        %1563 = vmatpush.msra.mxu0 %v1546
        %1564 = vmatpush.msra.mxu0 %v1545
        %1565 = vmatpush.msra.mxu0 %v1544
        %1566 = vmatpush.msra.mxu0 %v1543
        %1567 = vmatmul.f32.gmra.mxu0 %v1509
        %v1568 = vpop.f32.mrf.mxu0
        %v1569 = vadd.f32 %v1549, %v1568
        %1570 = vmatmul.f32.gmra.mxu0 %v1512
        %v1571 = vpop.f32.mrf.mxu0
        %v1572 = vadd.f32 %v1549, %v1571
        %1573 = vdwg.mxu0
        %v1574 = vld [vmem:[%s11] sm:$0xff]
        %v1575 = vld [vmem:[%s11 + $0x8] sm:$0xff]
        %v1576 = vld [vmem:[%s11 + $0x10] sm:$0xff]
        %v1577 = vld [vmem:[%s11 + $0x18] sm:$0xff]
        %v1578 = vld [vmem:[%s15] sm:$0xff]
        %v1579 = vld [vmem:[%s15 + $0x8] sm:$0xff]
        %v1580 = vld [vmem:[%s15 + $0x10] sm:$0xff]
        %v1581 = vld [vmem:[%s15 + $0x18] sm:$0xff]
        %v1582 = vld [vmem:[%s981] sm:$0xff]
        %v1583 = vld [vmem:[%s45] sm:$0xff]
        %v1584 = vld [vmem:[%s45 + $0x8] sm:$0xff]
        %v1585 = vld [vmem:[%s45 + $0x10] sm:$0xff]
        %v1586 = vld [vmem:[%s45 + $0x18] sm:$0xff]
        %v1587 = vld [vmem:[%s47] sm:$0x1]
        %1592 = vrot.lane.b32.xlu0 %v1532, 16
        %v1593 = vpop.permute.xlu0 %1592
        %1594 = vrot.lane.b32.xlu0 %v1535, 16
        %v1595 = vpop.permute.xlu0 %1594
        %1596 = vrot.lane.b32.xlu0 %v1538, 16
        %v1597 = vpop.permute.xlu0 %1596
        %1598 = vrot.lane.b32.xlu0 %v1541, 16
        %v1599 = vpop.permute.xlu0 %1598
        %1604 = vrot.lane.b32.xlu0 %v1532, 32
        %v1605 = vpop.permute.xlu0 %1604
        %1606 = vrot.lane.b32.xlu0 %v1535, 32
        %v1607 = vpop.permute.xlu0 %1606
        %1608 = vrot.lane.b32.xlu0 %v1538, 32
        %v1609 = vpop.permute.xlu0 %1608
        %1610 = vrot.lane.b32.xlu0 %v1541, 32
        %v1611 = vpop.permute.xlu0 %1610
        %1616 = vrot.lane.b32.xlu0 %v1532, 48
        %v1617 = vpop.permute.xlu0 %1616
        %1618 = vrot.lane.b32.xlu0 %v1535, 48
        %v1619 = vpop.permute.xlu0 %1618
        %1620 = vrot.lane.b32.xlu0 %v1538, 48
        %v1621 = vpop.permute.xlu0 %1620
        %1622 = vrot.lane.b32.xlu0 %v1541, 48
        %v1623 = vpop.permute.xlu0 %1622
        %v1628 = vsel %vm1150, %v1532, %v1593
        %v1629 = vsel %vm1150, %v1535, %v1595
        %v1630 = vsel %vm1150, %v1538, %v1597
        %v1631 = vsel %vm1150, %v1541, %v1599
        %v1632 = vsel %vm998, %v1628, %v1605
        %v1633 = vsel %vm998, %v1629, %v1607
        %v1634 = vsel %vm998, %v1630, %v1609
        %v1635 = vsel %vm998, %v1631, %v1611
        %vm1636 = vcmask 392192
        %v1637 = vsel %vm1636, %v1632, %v1617
        %v1638 = vsel %vm1636, %v1633, %v1619
        %v1639 = vsel %vm1636, %v1634, %v1621
        %v1640 = vsel %vm1636, %v1635, %v1623
        %v1641 = vmul.f32 %v1637, %v1574
        %v1642 = vmul.f32 %v1638, %v1575
        %v1643 = vmul.f32 %v1639, %v1576
        %v1644 = vmul.f32 %v1640, %v1577
        %v1646 = vsel %vm998, %v1466, 0
        %1648 = vmatpush.msra.mxu0 0.0
        %1649 = vmatpush.msra.mxu0 0.0
        %1650 = vmatpush.msra.mxu0 0.0
        %1651 = vmatpush.msra.mxu0 0.0
        %1652 = vmatpush.msra.mxu0 0.0
        %1653 = vmatpush.msra.mxu0 0.0
        %1654 = vmatpush.msra.mxu0 0.0
        %1655 = vmatpush.msra.mxu0 0.0
        %1656 = vmatpush.msra.mxu0 0.0
        %1657 = vmatpush.msra.mxu0 0.0
        %1658 = vmatpush.msra.mxu0 0.0
        %1659 = vmatpush.msra.mxu0 0.0
        %1660 = vmatpush.msra.mxu0 %v1644
        %1661 = vmatpush.msra.mxu0 %v1643
        %1662 = vmatpush.msra.mxu0 %v1642
        %1663 = vmatpush.msra.mxu0 %v1641
        %1664 = vmatmul.f32.gmra.mxu0 %v1646
        %v1665 = vpop.f32.mrf.mxu0
        %v1666 = vadd.f32 0.0, %v1665
        %1667 = vdwg.mxu0
        %vm1668 = vcmp.eq.f32.partialorder %v1582, 0.0
        %v1669 = vsel %vm1668, -1e+09, %v1666
        %vm1670 = vcmask 523264
        %v1671 = vsel %vm1670, %v1669, -inf
        %v1672 = vrot.slane %v1671, 4
        %v1673 = vmax.f32 %v1671, %v1672
        %v1674 = vrot.slane %v1673, 2
        %v1675 = vmax.f32 %v1673, %v1674
        %v1676 = vrot.slane %v1675, 1
        %v1677 = vmax.f32 %v1675, %v1676
        %v1678 = vsub.f32 %v1669, %v1677
        %v1679 = vmul.f32 %v1678, 1.442695
        %v1680 = vpow.pop %v1679
        %v1681 = vsel %vm1670, %v1680, 0.0
        %v1682 = vrot.slane %v1681, 4
        %v1683 = vadd.f32 %v1681, %v1682
        %v1684 = vrot.slane %v1683, 2
        %v1685 = vadd.f32 %v1683, %v1684
        %v1686 = vrot.slane %v1685, 1
        %v1687 = vadd.f32 %v1685, %v1686
        %v1688 = vrcp.pop %v1687
        %v1689 = vmul.f32 %v1687, %v1688
        %v1690 = vsub.f32 2.0, %v1689
        %v1691 = vmul.f32 %v1688, %v1690
        %v1692 = vmul.f32 %v1680, %v1691
        %1695 = vrot.lane.b32.xlu0 %v1569, 120
        %v1696 = vpop.permute.xlu0 %1695
        %1697 = vrot.lane.b32.xlu0 %v1572, 120
        %v1698 = vpop.permute.xlu0 %1697
        %1701 = vrot.lane.b32.xlu0 %v1569, 112
        %v1702 = vpop.permute.xlu0 %1701
        %1703 = vrot.lane.b32.xlu0 %v1572, 112
        %v1704 = vpop.permute.xlu0 %1703
        %1707 = vrot.lane.b32.xlu0 %v1569, 104
        %v1708 = vpop.permute.xlu0 %1707
        %1709 = vrot.lane.b32.xlu0 %v1572, 104
        %v1710 = vpop.permute.xlu0 %1709
        %v1713 = vmul.f32 %v1692, %v1578
        %v1714 = vmul.f32 %v1692, %v1579
        %v1715 = vmul.f32 %v1692, %v1580
        %v1716 = vmul.f32 %v1692, %v1581
        %v1718 = vsel %vm1670, %v1713, 0
        %v1721 = vsel %vm1670, %v1714, 0
        %v1724 = vsel %vm1670, %v1715, 0
        %v1727 = vsel %vm1670, %v1716, 0
        %1729 = vmatpush.msra.mxu0 0.0
        %1730 = vmatpush.msra.mxu0 0.0
        %1731 = vmatpush.msra.mxu0 0.0
        %1732 = vmatpush.msra.mxu0 0.0
        %1733 = vmatpush.msra.mxu0 0.0
        %1734 = vmatpush.msra.mxu0 0.0
        %1735 = vmatpush.msra.mxu0 0.0
        %1736 = vmatpush.msra.mxu0 0.0
        %1737 = vmatpush.msra.mxu0 %v1710
        %1738 = vmatpush.msra.mxu0 %v1708
        %1739 = vmatpush.msra.mxu0 %v1704
        %1740 = vmatpush.msra.mxu0 %v1702
        %1741 = vmatpush.msra.mxu0 %v1698
        %1742 = vmatpush.msra.mxu0 %v1696
        %1743 = vmatpush.msra.mxu0 %v1572
        %1744 = vmatpush.msra.mxu0 %v1569
        %1745 = vmatmul.f32.gmra.mxu0 %v1718
        %v1746 = vpop.f32.mrf.mxu0
        %v1747 = vadd.f32 0.0, %v1746
        %1748 = vmatmul.f32.gmra.mxu0 %v1721
        %v1749 = vpop.f32.mrf.mxu0
        %v1750 = vadd.f32 0.0, %v1749
        %1751 = vmatmul.f32.gmra.mxu0 %v1724
        %v1752 = vpop.f32.mrf.mxu0
        %v1753 = vadd.f32 0.0, %v1752
        %1754 = vmatmul.f32.gmra.mxu0 %v1727
        %v1755 = vpop.f32.mrf.mxu0
        %v1756 = vadd.f32 0.0, %v1755
        %1757 = vdwg.mxu0
        %1762 = vrot.lane.b32.xlu0 %v1747, 8
        %v1763 = vpop.permute.xlu0 %1762
        %1764 = vrot.lane.b32.xlu0 %v1750, 8
        %v1765 = vpop.permute.xlu0 %1764
        %1766 = vrot.lane.b32.xlu0 %v1753, 8
        %v1767 = vpop.permute.xlu0 %1766
        %1768 = vrot.lane.b32.xlu0 %v1756, 8
        %v1769 = vpop.permute.xlu0 %1768
        %1774 = vrot.lane.b32.xlu0 %v1747, 16
        %v1775 = vpop.permute.xlu0 %1774
        %1776 = vrot.lane.b32.xlu0 %v1750, 16
        %v1777 = vpop.permute.xlu0 %1776
        %1778 = vrot.lane.b32.xlu0 %v1753, 16
        %v1779 = vpop.permute.xlu0 %1778
        %1780 = vrot.lane.b32.xlu0 %v1756, 16
        %v1781 = vpop.permute.xlu0 %1780
        %1786 = vrot.lane.b32.xlu0 %v1747, 24
        %v1787 = vpop.permute.xlu0 %1786
        %1788 = vrot.lane.b32.xlu0 %v1750, 24
        %v1789 = vpop.permute.xlu0 %1788
        %1790 = vrot.lane.b32.xlu0 %v1753, 24
        %v1791 = vpop.permute.xlu0 %1790
        %1792 = vrot.lane.b32.xlu0 %v1756, 24
        %v1793 = vpop.permute.xlu0 %1792
        %v1798 = vsel %vm1145, %v1747, %v1763
        %v1799 = vsel %vm1145, %v1750, %v1765
        %v1800 = vsel %vm1145, %v1753, %v1767
        %v1801 = vsel %vm1145, %v1756, %v1769
        %v1802 = vsel %vm1150, %v1798, %v1775
        %v1803 = vsel %vm1150, %v1799, %v1777
        %v1804 = vsel %vm1150, %v1800, %v1779
        %v1805 = vsel %vm1150, %v1801, %v1781
        %v1806 = vsel %vm1155, %v1802, %v1787
        %v1807 = vsel %vm1155, %v1803, %v1789
        %v1808 = vsel %vm1155, %v1804, %v1791
        %v1809 = vsel %vm1155, %v1805, %v1793
        %v1810 = vmul.f32 %v1806, %v982
        %v1811 = vmul.f32 %v1807, %v983
        %v1812 = vmul.f32 %v1808, %v984
        %v1813 = vmul.f32 %v1809, %v985
        %v1815 = vsel %vm998, %v1810, 0
        %v1818 = vsel %vm998, %v1811, 0
        %v1821 = vsel %vm998, %v1812, 0
        %v1824 = vsel %vm998, %v1813, 0
        %1826 = vmatpush.msra.mxu0 0.0
        %1827 = vmatpush.msra.mxu0 0.0
        %1828 = vmatpush.msra.mxu0 0.0
        %1829 = vmatpush.msra.mxu0 0.0
        %1830 = vmatpush.msra.mxu0 0.0
        %1831 = vmatpush.msra.mxu0 0.0
        %1832 = vmatpush.msra.mxu0 0.0
        %1833 = vmatpush.msra.mxu0 0.0
        %1834 = vmatpush.msra.mxu0 0.0
        %1835 = vmatpush.msra.mxu0 0.0
        %1836 = vmatpush.msra.mxu0 0.0
        %1837 = vmatpush.msra.mxu0 0.0
        %1838 = vmatpush.msra.mxu0 %v1586
        %1839 = vmatpush.msra.mxu0 %v1585
        %1840 = vmatpush.msra.mxu0 %v1584
        %1841 = vmatpush.msra.mxu0 %v1583
        %1842 = vmatmul.f32.gmra.mxu0 %v1815
        %v1843 = vpop.f32.mrf.mxu0
        %v1844 = vadd.f32 0.0, %v1843
        %1845 = vmatmul.f32.gmra.mxu0 %v1818
        %v1846 = vpop.f32.mrf.mxu0
        %v1847 = vadd.f32 0.0, %v1846
        %1848 = vmatmul.f32.gmra.mxu0 %v1821
        %v1849 = vpop.f32.mrf.mxu0
        %v1850 = vadd.f32 0.0, %v1849
        %1851 = vmatmul.f32.gmra.mxu0 %v1824
        %v1852 = vpop.f32.mrf.mxu0
        %v1853 = vadd.f32 0.0, %v1852
        %1854 = vdwg.mxu0
        %v1856 = vperm.slane %v1587, 0
        %1858 = vmatpush.msra.mxu0 0.0
        %1859 = vmatpush.msra.mxu0 0.0
        %1860 = vmatpush.msra.mxu0 0.0
        %1861 = vmatpush.msra.mxu0 0.0
        %1862 = vmatpush.msra.mxu0 0.0
        %1863 = vmatpush.msra.mxu0 0.0
        %1864 = vmatpush.msra.mxu0 0.0
        %1865 = vmatpush.msra.mxu0 0.0
        %1866 = vmatpush.msra.mxu0 0.0
        %1867 = vmatpush.msra.mxu0 0.0
        %1868 = vmatpush.msra.mxu0 0.0
        %1869 = vmatpush.msra.mxu0 0.0
        %1870 = vmatpush.msra.mxu0 %v1853
        %1871 = vmatpush.msra.mxu0 %v1850
        %1872 = vmatpush.msra.mxu0 %v1847
        %1873 = vmatpush.msra.mxu0 %v1844
        %1874 = vmatmul.f32.gmra.mxu0 %v1375
        %v1875 = vpop.f32.mrf.mxu0
        %v1876 = vadd.f32 %v1856, %v1875
        %1877 = vdwg.mxu0
        %v1878 = vadd.f32 %v1436, %v1876
        %s1879 = scalar_lea.vmem %s49, 1
        %v1880 = vld [vmem:[%s1879] sm:$0x1]
        %s1881 = scalar_lea.vmem %s51, 1
        %v1882 = vld [vmem:[%s1881] sm:$0x1]
        %v1883 = vsel %vm998, %v1878, 0.0
        %1884 = vadd.xlane.f32.xlu0 %v1883
        %v1885 = vpop.xlane.xlu0 %1884
        %v1886 = vmul.f32 %v1885, %v1409
        %v1887 = vsub.f32 %v1878, %v1886
        %v1888 = vmul.f32 %v1887, %v1887
        %v1889 = vsel %vm998, %v1888, 0.0
        %1890 = vadd.xlane.f32.xlu0 %v1889
        %v1891 = vpop.xlane.xlu0 %1890
        %v1892 = vmul.f32 %v1891, %v1409
        %v1893 = vadd.f32 %v1892, 1e-05
        %v1894 = vrsqrt.pop %v1893
        %v1895 = vmul.f32 %v1894, %v1893
        %v1896 = vmul.f32 %v1895, %v1894
        %v1897 = vmul.f32 0.5, %v1896
        %v1898 = vsub.f32 1.5, %v1897
        %v1899 = vmul.f32 %v1894, %v1898
        %vm1900 = vweird.f32 %v1893
        %vm1901 = vweird.f32 %v1894
        %vm1902 = vmor %vm1900, %vm1901
        %v1903 = vsel %vm1902, %v1894, %v1899
        %v1904 = vmul.f32 %v1887, %v1903
        %v1906 = vperm.slane %v1880, 0
        %v1908 = vmul.f32 %v1904, %v1906
        %v1910 = vperm.slane %v1882, 0
        %v1912 = vadd.f32 %v1908, %v1910
        %v1913 = vld [vmem:[%s53] sm:$0xff]
        %v1914 = vld [vmem:[%s53 + $0x8] sm:$0xff]
        %v1915 = vld [vmem:[%s53 + $0x10] sm:$0xff]
        %v1916 = vld [vmem:[%s53 + $0x18] sm:$0xff]
        %v1917 = vld [vmem:[%s55] sm:$0x1]
        %v1919 = vperm.slane %v1917, 0
        %v1922 = vsel %vm998, %v1912, 0
        %1924 = vmatpush.msra.mxu0 0.0
        %1925 = vmatpush.msra.mxu0 0.0
        %1926 = vmatpush.msra.mxu0 0.0
        %1927 = vmatpush.msra.mxu0 0.0
        %1928 = vmatpush.msra.mxu0 0.0
        %1929 = vmatpush.msra.mxu0 0.0
        %1930 = vmatpush.msra.mxu0 0.0
        %1931 = vmatpush.msra.mxu0 0.0
        %1932 = vmatpush.msra.mxu0 0.0
        %1933 = vmatpush.msra.mxu0 0.0
        %1934 = vmatpush.msra.mxu0 0.0
        %1935 = vmatpush.msra.mxu0 0.0
        %1936 = vmatpush.msra.mxu0 %v1916
        %1937 = vmatpush.msra.mxu0 %v1915
        %1938 = vmatpush.msra.mxu0 %v1914
        %1939 = vmatpush.msra.mxu0 %v1913
        %1940 = vmatmul.f32.gmra.mxu0 %v1922
        %v1941 = vpop.f32.mrf.mxu0
        %v1942 = vadd.f32 %v1919, %v1941
        %1943 = vdwg.mxu0
        %v1944 = vmax.f32 %v1942, 0.0
        %v1945 = vld [vmem:[%s57] sm:$0xff]
        %v1946 = vld [vmem:[%s57 + $0x8] sm:$0xff]
        %v1947 = vld [vmem:[%s57 + $0x10] sm:$0xff]
        %v1948 = vld [vmem:[%s57 + $0x18] sm:$0xff]
        %v1949 = vld [vmem:[%s57 + $0x20] sm:$0xff]
        %v1950 = vld [vmem:[%s57 + $0x28] sm:$0xff]
        %v1951 = vld [vmem:[%s57 + $0x30] sm:$0xff]
        %v1952 = vld [vmem:[%s57 + $0x38] sm:$0xff]
        %v1953 = vld [vmem:[%s59] sm:$0x1]
        %v1955 = vperm.slane %v1953, 0
        %v1958 = vsel %vm1670, %v1944, 0
        %1960 = vmatpush.msra.mxu0 0.0
        %1961 = vmatpush.msra.mxu0 0.0
        %1962 = vmatpush.msra.mxu0 0.0
        %1963 = vmatpush.msra.mxu0 0.0
        %1964 = vmatpush.msra.mxu0 0.0
        %1965 = vmatpush.msra.mxu0 0.0
        %1966 = vmatpush.msra.mxu0 0.0
        %1967 = vmatpush.msra.mxu0 0.0
        %1968 = vmatpush.msra.mxu0 %v1952
        %1969 = vmatpush.msra.mxu0 %v1951
        %1970 = vmatpush.msra.mxu0 %v1950
        %1971 = vmatpush.msra.mxu0 %v1949
        %1972 = vmatpush.msra.mxu0 %v1948
        %1973 = vmatpush.msra.mxu0 %v1947
        %1974 = vmatpush.msra.mxu0 %v1946
        %1975 = vmatpush.msra.mxu0 %v1945
        %1976 = vmatmul.f32.gmra.mxu0 %v1958
        %v1977 = vpop.f32.mrf.mxu0
        %v1978 = vadd.f32 %v1955, %v1977
        %1979 = vdwg.mxu0
        %v1980 = vadd.f32 %v1912, %v1978
        %s1981 = scalar_lea.vmem %s49, 2
        %v1982 = vld [vmem:[%s1981] sm:$0x1]
        %s1983 = scalar_lea.vmem %s51, 2
        %v1984 = vld [vmem:[%s1983] sm:$0x1]
        %v1985 = vsel %vm998, %v1980, 0.0
        %1986 = vadd.xlane.f32.xlu0 %v1985
        %v1987 = vpop.xlane.xlu0 %1986
        %v1988 = vmul.f32 %v1987, %v1409
        %v1989 = vsub.f32 %v1980, %v1988
        %v1990 = vmul.f32 %v1989, %v1989
        %v1991 = vsel %vm998, %v1990, 0.0
        %1992 = vadd.xlane.f32.xlu0 %v1991
        %v1993 = vpop.xlane.xlu0 %1992
        %v1994 = vmul.f32 %v1993, %v1409
        %v1995 = vadd.f32 %v1994, 1e-05
        %v1996 = vrsqrt.pop %v1995
        %v1997 = vmul.f32 %v1996, %v1995
        %v1998 = vmul.f32 %v1997, %v1996
        %v1999 = vmul.f32 0.5, %v1998
        %v2000 = vsub.f32 1.5, %v1999
        %v2001 = vmul.f32 %v1996, %v2000
        %vm2002 = vweird.f32 %v1995
        %vm2003 = vweird.f32 %v1996
        %vm2004 = vmor %vm2002, %vm2003
        %v2005 = vsel %vm2004, %v1996, %v2001
        %v2006 = vmul.f32 %v1989, %v2005
        %v2008 = vperm.slane %v1982, 0
        %v2010 = vmul.f32 %v2006, %v2008
        %v2012 = vperm.slane %v1984, 0
        %v2014 = vadd.f32 %v2010, %v2012
        %2015 = vst.msk [vmem:[%s963] sm:$0xff] %vm998, %v2014
        %s2016 = sand.u32 %s733, 1
        %s2017 = scalar_lea.sflag [#allocation3], %s2016
        %s2018 = sand.u32 %s733, 1
        %s2019 = smul.addr %s2018, 8
        %s2020 = scalar_lea.vmem [#allocation2], %s2019
        // Predicated region
        $region141: #{decoder_layer_pallas.1} parent=139 // pred_check
          %p2021 = pneg %p743
        $region142: #{decoder_layer_pallas.1} parent=139 // pred_check_branch
          %2023 = sbr.rel (%p2021) target = $region144
        $region143: #{decoder_layer_pallas.1} parent=139 // pred_region
          %2025 = vsyncadd %s2017, 0
          %s2026 = smul.addr %s75, 8
          %s2027 = scalar_lea.hbm %s61, %s2026
          %s2029 = sshll.u32 %s2020, 4
          %s2030 = int_to_ptr.vmem [resolvable:$true] %s2029
          %s2031 = sshll.u32 %s2027, 4
          %s2032 = int_to_ptr.hbm [resolvable:$true] %s2031
          %2034 = dma.vmem_to_hbm [thread:$0]  %s2030, 128, %s2032, %s2017
        $region144: #{decoder_layer_pallas.1} parent=139 // pred_fallthru
          _
      $region140: #{decoder_layer_pallas.1} parent=5 // pred_fallthru
        _
      %p2035 = scmp.le.s32.totalorder 2, %s70
      // Predicated region
      $region145: #{decoder_layer_pallas.1} parent=5 // pred_check
        %p2036 = pneg %p2035
      $region146: #{decoder_layer_pallas.1} parent=5 // pred_check_branch
        %2038 = sbr.rel (%p2036) target = $region148
      $region147: #{decoder_layer_pallas.1} parent=5 // pred_region
        %s2039 = ssub.s32 %s70, 2
        // Predicated region
        $region149: #{decoder_layer_pallas.1} parent=147 // pred_check
          %p2040 = pneg %p749
        $region150: #{decoder_layer_pallas.1} parent=147 // pred_check_branch
          %2042 = sbr.rel (%p2040) target = $region152
        $region151: #{decoder_layer_pallas.1} parent=147 // pred_region
          %s2043 = sand.u32 %s734, 1
          %s2044 = scalar_lea.sflag [#allocation3], %s2043
          %s2045 = sand.u32 %s734, 1
          %s2046 = smul.addr %s2045, 8
          %s2047 = scalar_lea.vmem [#allocation2], %s2046
          %2049 = dma.done %s2044, 128
        $region152: #{decoder_layer_pallas.1} parent=147 // pred_fallthru
          _
      $region148: #{decoder_layer_pallas.1} parent=5 // pred_fallthru
        _
    $region6: #{decoder_layer_pallas.1} parent=1 // loop_footer
      %s74 = sadd.s32 1, %s70
    $region7: #{decoder_layer_pallas.1} parent=1 // loop_footer_branch
      %69 = sbr.rel target = $region3
    $region8: #{decoder_layer_pallas.1} parent=1 // loop_exit
      _
    %2050 = vsyncpa [#allocation3], 1
    %s2051 = scalar_lea.sflag [#allocation3], 1
    %2052 = vsyncpa %s2051, 1

</llo_original>
